<compile_context>
chip_gen: v6e
topology: v6e:2x2x1
jax: 0.10.0
libtpu: 0.0.40
codegen_flags: <defaults>
</compile_context>

<pallas_src>
import functools

import jax
import jax.numpy as jnp
from jax.experimental import pallas as pl
from jax.experimental.pallas import tpu as pltpu


# ----------------------------------------------------------------------------
# Small helpers
# ----------------------------------------------------------------------------
def _pick_tile(dim, target, align):
    """Largest legal tile <= target: full extent, or an `align` multiple."""
    if dim <= target:
        return dim                       # full-extent block is always legal
    return max((target // align) * align, align)


def _scoped_vmem_limit(frac=0.75):
    """Raise the scoped VMEM limit with headroom (128MiB v5e/v6e, 64MiB v7x)."""
    try:
        return int(pltpu.get_tpu_info().vmem_capacity_bytes * frac)
    except Exception:
        return None                      # fall back to compiler default


# ----------------------------------------------------------------------------
# Tiled matmul + bias kernel (hoisted x-projection and the decoder).
# Grid = (M tiles, N tiles, K tiles); K is an "arbitrary" reduction axis with
# an f32 VMEM accumulator (bias folded in at k == 0).
# ----------------------------------------------------------------------------
def _matmul_bias_kernel(x_ref, w_ref, b_ref, o_ref, acc_ref):
    @pl.when(pl.program_id(2) == 0)
    def _():
        acc_ref[...] = jnp.broadcast_to(b_ref[...],
                                        acc_ref.shape).astype(jnp.float32)

    acc_ref[...] += jnp.dot(x_ref[...], w_ref[...],
                            preferred_element_type=jnp.float32)

    @pl.when(pl.program_id(2) == pl.num_programs(2) - 1)
    def _():
        o_ref[...] = acc_ref[...].astype(o_ref.dtype)


def matmul_bias(x, w_t, b, *, out_dtype=jnp.float32,
                tm_target=256, tn_target=512, tk_target=512):
    """y = x @ w_t + b, tiled over (rows, cols, reduction); bf16 operands."""
    m, k = x.shape
    n = w_t.shape[1]
    tm = _pick_tile(m, tm_target, 256)    # MXU-friendly row tile (8-aligned)
    tn = _pick_tile(n, tn_target, 256)    # lane-dense, MXU-friendly col tile
    # Only K-tile when the reduction dim is both large and 128-divisible so
    # remainder K blocks (whose padding would corrupt the accumulation) never
    # occur; otherwise keep the full-extent K block.
    tk = _pick_tile(k, tk_target, 128) if (k > tk_target and k % 128 == 0) else k

    x_b = x.astype(jnp.bfloat16)
    w_b = w_t.astype(jnp.bfloat16)
    b2 = b.reshape(1, n).astype(jnp.float32)
    out_bytes = 2 if out_dtype == jnp.bfloat16 else 4

    grid = (pl.cdiv(m, tm), pl.cdiv(n, tn), pl.cdiv(k, tk))
    return pl.pallas_call(
        _matmul_bias_kernel,
        out_shape=jax.ShapeDtypeStruct((m, n), out_dtype),
        grid=grid,
        in_specs=[
            pl.BlockSpec((tm, tk), lambda i, j, kk: (i, kk)),   # row tile of X
            pl.BlockSpec((tk, tn), lambda i, j, kk: (kk, j)),   # col tile of W^T
            pl.BlockSpec((1, tn), lambda i, j, kk: (0, j)),     # bias slice
        ],
        out_specs=pl.BlockSpec((tm, tn), lambda i, j, kk: (i, j)),
        scratch_shapes=[pltpu.VMEM((tm, tn), jnp.float32)],     # f32 accumulator
        compiler_params=pltpu.CompilerParams(
            dimension_semantics=("parallel", "parallel", "arbitrary"),
            vmem_limit_bytes=_scoped_vmem_limit()),
        cost_estimate=pl.CostEstimate(
            flops=2 * m * k * n,
            transcendentals=0,
            bytes_accessed=m * k * 2 + k * n * 2 + n * 4 + m * n * out_bytes),
    )(x_b, w_b, b2)


# ----------------------------------------------------------------------------
# LSTM recurrence kernel: grid over time CHUNKS, partially-unrolled loop inside
# a chunk. Input projection (x @ W_ih^T + b) is precomputed outside (gx, bf16).
# ----------------------------------------------------------------------------
def _lstm_recurrent_kernel(gx_ref, whh_ref, h0_ref, c0_ref,
                           y_ref, hN_ref, cN_ref, h_sc, c_sc,
                           *, nhid, t_chunk, seq_len, unroll, exact):
    chunk = pl.program_id(0)

    @pl.when(chunk == 0)
    def _():
        h_sc[...] = h0_ref[...]
        c_sc[...] = c0_ref[...]

    whh = whh_ref[...]                     # (nhid, 4*nhid) bf16, hoisted load
    if not exact:
        # Remainder chunk: number of real timesteps in this block.
        n_valid = jnp.minimum(t_chunk, seq_len - chunk * t_chunk)

    def step(t, carry):
        h, c = carry
        # gates = (x @ W_ih^T + b) + h @ W_hh^T   -> (batch, 4*nhid) f32
        gates = (gx_ref[t].astype(jnp.float32)
                 + jnp.dot(h.astype(jnp.bfloat16), whh,
                           preferred_element_type=jnp.float32))
        i_f = jax.nn.sigmoid(gates[:, :2 * nhid])        # [i | f] in one launch
        g = jnp.tanh(gates[:, 2 * nhid:3 * nhid])
        o = jax.nn.sigmoid(gates[:, 3 * nhid:])
        c_new = i_f[:, nhid:] * c + i_f[:, :nhid] * g
        h_new = o * jnp.tanh(c_new)
        y_ref[t] = h_new.astype(y_ref.dtype)             # bf16 y writeback
        if not exact:
            valid = t < n_valid
            h_new = jnp.where(valid, h_new, h)           # freeze carry on pad
            c_new = jnp.where(valid, c_new, c)
        return h_new, c_new

    h, c = jax.lax.fori_loop(0, t_chunk, step,
                             (h_sc[...], c_sc[...]), unroll=unroll)
    h_sc[...] = h                          # carry written once per chunk
    c_sc[...] = c

    @pl.when(chunk == pl.num_programs(0) - 1)
    def _():
        hN_ref[...] = h                    # final state written once
        cN_ref[...] = c


def lstm_layer(x, w_ih, w_hh, b_ih, b_hh, h0, c0, *, t_chunk_target=32):
    """One PyTorch-semantics LSTM layer over the whole sequence."""
    S, B, in_dim = x.shape
    nhid = h0.shape[-1]

    # Hoisted input projection: one big (S*B, in_dim) x (in_dim, 4*nhid) matmul.
    # Emitted in bf16 (dominant HBM stream of the recurrence, halved traffic);
    # the recurrence accumulates it back into an f32 gate tensor.
    gx = matmul_bias(
        x.reshape(S * B, in_dim),
        jnp.asarray(w_ih, jnp.float32).T,
        jnp.asarray(b_ih, jnp.float32) + jnp.asarray(b_hh, jnp.float32),
        out_dtype=jnp.bfloat16, tm_target=256, tn_target=512)
    gx = gx.reshape(S, B, 4 * nhid)

    whh_t = jnp.asarray(w_hh, jnp.float32).T.astype(jnp.bfloat16)

    t_chunk = min(S, t_chunk_target)
    n_chunks = pl.cdiv(S, t_chunk)
    exact = (S % t_chunk == 0)             # remainder chunk handled via masking
    unroll = True if t_chunk <= 8 else 8   # partial unroll keeps vreg pressure sane

    kernel = functools.partial(_lstm_recurrent_kernel, nhid=nhid,
                               t_chunk=t_chunk, seq_len=S,
                               unroll=unroll, exact=exact)

    y, hN, cN = pl.pallas_call(
        kernel,
        out_shape=(
            jax.ShapeDtypeStruct((S, B, nhid), jnp.bfloat16),   # y in bf16
            jax.ShapeDtypeStruct((B, nhid), jnp.float32),
            jax.ShapeDtypeStruct((B, nhid), jnp.float32),
        ),
        grid_spec=pltpu.PrefetchScalarGridSpec(
            num_scalar_prefetch=0,
            grid=(n_chunks,),
            in_specs=[
                pl.BlockSpec((t_chunk, B, 4 * nhid), lambda c: (c, 0, 0)),  # gx
                pl.BlockSpec((nhid, 4 * nhid), lambda c: (0, 0)),           # Whh^T
                pl.BlockSpec((B, nhid), lambda c: (0, 0)),                  # h0
                pl.BlockSpec((B, nhid), lambda c: (0, 0)),                  # c0
            ],
            out_specs=(
                pl.BlockSpec((t_chunk, B, nhid), lambda c: (c, 0, 0)),      # y
                pl.BlockSpec((B, nhid), lambda c: (0, 0)),                  # h_N
                pl.BlockSpec((B, nhid), lambda c: (0, 0)),                  # c_N
            ),
            scratch_shapes=[
                pltpu.VMEM((B, nhid), jnp.float32),   # h carry
                pltpu.VMEM((B, nhid), jnp.float32),   # c carry
            ],
        ),
        compiler_params=pltpu.CompilerParams(
            dimension_semantics=("arbitrary",),       # sequential time axis
            vmem_limit_bytes=_scoped_vmem_limit()),
        cost_estimate=pl.CostEstimate(
            flops=2 * S * B * nhid * 4 * nhid + 10 * S * B * nhid,
            transcendentals=5 * S * B * nhid,
            bytes_accessed=(S * B * 4 * nhid * 2      # gx (bf16)
                            + nhid * 4 * nhid * 2     # Whh^T (bf16)
                            + S * B * nhid * 2        # y (bf16)
                            + 4 * B * nhid * 4)),     # h0/c0/hN/cN
    )(gx, whh_t, jnp.asarray(h0, jnp.float32), jnp.asarray(c0, jnp.float32))
    return y, hN, cN


# ----------------------------------------------------------------------------
# Parameter init (deterministic, mirrors the PyTorch module's shapes/init).
# ----------------------------------------------------------------------------
def init_params(key, ntokens, ninp, nhid, nlayers):
    initrange = 0.1
    params = {}
    key, k_enc, k_dec = jax.random.split(key, 3)
    params["encoder_weight"] = jax.random.uniform(
        k_enc, (ntokens, ninp), jnp.float32, -initrange, initrange)
    params["decoder_weight"] = jax.random.uniform(
        k_dec, (ntokens, nhid), jnp.float32, -initrange, initrange)
    params["decoder_bias"] = jnp.zeros((ntokens,), jnp.float32)

    stdv = 1.0 / jnp.sqrt(nhid)
    for l in range(nlayers):
        in_dim = ninp if l == 0 else nhid
        key, k1, k2, k3, k4 = jax.random.split(key, 5)
        params[f"w_ih_l{l}"] = jax.random.uniform(
            k1, (4 * nhid, in_dim), jnp.float32, -stdv, stdv)
        params[f"w_hh_l{l}"] = jax.random.uniform(
            k2, (4 * nhid, nhid), jnp.float32, -stdv, stdv)
        params[f"b_ih_l{l}"] = jax.random.uniform(
            k3, (4 * nhid,), jnp.float32, -stdv, stdv)
        params[f"b_hh_l{l}"] = jax.random.uniform(
            k4, (4 * nhid,), jnp.float32, -stdv, stdv)
    return params


def init_hidden(nlayers, bsz, nhid):
    return (jnp.zeros((nlayers, bsz, nhid), jnp.float32),
            jnp.zeros((nlayers, bsz, nhid), jnp.float32))


# ----------------------------------------------------------------------------
# Full forward pass (matches RNNModel.forward, dropout = identity / eval).
# ----------------------------------------------------------------------------
def rnn_model_forward(params, tokens, hidden, nlayers):
    h0_all, c0_all = hidden

    # Embedding lookup (glue: gather stays in plain JAX).
    emb = jnp.take(params["encoder_weight"], tokens, axis=0)   # (S, B, ninp)

    x = emb
    h_finals, c_finals = [], []
    for l in range(nlayers):
        x, hN, cN = lstm_layer(
            x,
            params[f"w_ih_l{l}"], params[f"w_hh_l{l}"],
            params[f"b_ih_l{l}"], params[f"b_hh_l{l}"],
            h0_all[l], c0_all[l])
        h_finals.append(hN)
        c_finals.append(cN)

    output = x                                                 # (S, B, nhid) bf16
    S, B, H = output.shape
    # Decoder: large tm so the vocab-sized weight is streamed from HBM as few
    # times as possible (one pass when S*B fits a single row tile).
    decoded = matmul_bias(output.reshape(S * B, H),
                          jnp.asarray(params["decoder_weight"], jnp.float32).T,
                          params["decoder_bias"],
                          out_dtype=jnp.float32,
                          tm_target=1024, tn_target=1024)
    decoded = decoded.reshape(S, B, -1)                        # (S, B, ntokens)
    new_hidden = (jnp.stack(h_finals, axis=0), jnp.stack(c_finals, axis=0))
    return decoded, new_hidden


# ----------------------------------------------------------------------------
if __name__ == "__main__":
    ntokens, ninp, nhid, nlayers = 50, 16, 32, 2
    seq_len, batch = 8, 2

    key = jax.random.PRNGKey(0)
    key, k_params, k_tok = jax.random.split(key, 3)

    params = init_params(k_params, ntokens, ninp, nhid, nlayers)
    tokens = jax.random.randint(k_tok, (seq_len, batch), 0, ntokens, jnp.int32)
    hidden = init_hidden(nlayers, batch, nhid)

    forward = jax.jit(functools.partial(rnn_model_forward, nlayers=nlayers))
    decoded, (hN, cN) = forward(params, tokens, hidden)
    jax.block_until_ready((decoded, hN, cN))

    assert decoded.shape == (seq_len, batch, ntokens)
    assert hN.shape == (nlayers, batch, nhid)
    assert cN.shape == (nlayers, batch, nhid)
    print("KERNEL_OK")
</pallas_src>

<mosaic_0001>
module attributes {stable_mosaic.version = 11 : i64} {
  func.func @_matmul_bias_kernel(%arg0: i32, %arg1: i32, %arg2: i32, %arg3: memref<16x16xbf16, #tpu.memory_space<vmem>>, %arg4: memref<16x128xbf16, #tpu.memory_space<vmem>>, %arg5: memref<1x128xf32, #tpu.memory_space<vmem>>, %arg6: memref<16x128xbf16, #tpu.memory_space<vmem>>, %arg7: memref<16x128xf32, #tpu.memory_space<vmem>>) attributes {dimension_semantics = [#tpu.dimension_semantics<parallel>, #tpu.dimension_semantics<parallel>, #tpu.dimension_semantics<arbitrary>], iteration_bounds = array<i64: 1, 1, 1>, scalar_prefetch = 0 : i64, scratch_operands = 1 : i64, tpu.core_type = #tpu.core_type<tc>, window_params = [{transform_indices = @transform_0, window_bounds = array<i64: 16, 16>}, {transform_indices = @transform_1, window_bounds = array<i64: 16, 128>}, {transform_indices = @transform_2, window_bounds = array<i64: 1, 128>}, {transform_indices = @transform_3, window_bounds = array<i64: 16, 128>}]} {
    %c0_i32 = arith.constant 0 : i32
    %0 = arith.cmpi eq, %arg2, %c0_i32 : i32
    %1 = arith.extui %0 : i1 to i32
    %c0_i32_0 = arith.constant 0 : i32
    %2 = arith.cmpi ne, %1, %c0_i32_0 : i32
    scf.if %2 {
      %c0_10 = arith.constant 0 : index
      %c0_11 = arith.constant 0 : index
      %12 = vector.load %arg5[%c0_10, %c0_11] : memref<1x128xf32, #tpu.memory_space<vmem>>, vector<1x128xf32>
      %13 = vector.shape_cast %12 : vector<1x128xf32> to vector<1x128xf32>
      %14 = vector.broadcast %13 : vector<1x128xf32> to vector<16x128xf32>
      %c0_12 = arith.constant 0 : index
      %c0_13 = arith.constant 0 : index
      %15 = vector.load %arg7[%c0_12, %c0_13] : memref<16x128xf32, #tpu.memory_space<vmem>>, vector<16x128xf32>
      tpu.vector_store %arg7[%c0_12, %c0_13], %14 {strides = array<i32>} : memref<16x128xf32, #tpu.memory_space<vmem>>, vector<16x128xf32>,
    } else {
    }
    %c0 = arith.constant 0 : index
    %c0_1 = arith.constant 0 : index
    %3 = vector.load %arg7[%c0, %c0_1] : memref<16x128xf32, #tpu.memory_space<vmem>>, vector<16x128xf32>
    %c0_2 = arith.constant 0 : index
    %c0_3 = arith.constant 0 : index
    %4 = vector.load %arg3[%c0_2, %c0_3] : memref<16x16xbf16, #tpu.memory_space<vmem>>, vector<16x16xbf16>
    %c0_4 = arith.constant 0 : index
    %c0_5 = arith.constant 0 : index
    %5 = vector.load %arg4[%c0_4, %c0_5] : memref<16x128xbf16, #tpu.memory_space<vmem>>, vector<16x128xbf16>
    %cst = arith.constant dense<0.000000e+00> : vector<16x128xf32>
    %6 = tpu.matmul %4, %5, %cst {dimension_numbers = #tpu.dot_dimension_numbers<[1], [0], [0], [1], [0, 0, 1, 1], [], []>} : vector<16x16xbf16>, vector<16x128xbf16>, vector<16x128xf32> -> vector<16x128xf32>
    %7 = arith.addf %3, %6 : vector<16x128xf32>
    %c0_6 = arith.constant 0 : index
    %c0_7 = arith.constant 0 : index
    %8 = vector.load %arg7[%c0_6, %c0_7] : memref<16x128xf32, #tpu.memory_space<vmem>>, vector<16x128xf32>
    tpu.vector_store %arg7[%c0_6, %c0_7], %7 {strides = array<i32>} : memref<16x128xf32, #tpu.memory_space<vmem>>, vector<16x128xf32>,
    %c0_i32_8 = arith.constant 0 : i32
    %9 = arith.cmpi eq, %arg2, %c0_i32_8 : i32
    %10 = arith.extui %9 : i1 to i32
    %c0_i32_9 = arith.constant 0 : i32
    %11 = arith.cmpi ne, %10, %c0_i32_9 : i32
    scf.if %11 {
      %c0_10 = arith.constant 0 : index
      %c0_11 = arith.constant 0 : index
      %12 = vector.load %arg7[%c0_10, %c0_11] : memref<16x128xf32, #tpu.memory_space<vmem>>, vector<16x128xf32>
      %13 = arith.truncf %12 : vector<16x128xf32> to vector<16x128xbf16>
      %c0_12 = arith.constant 0 : index
      %c0_13 = arith.constant 0 : index
      %14 = vector.load %arg6[%c0_12, %c0_13] : memref<16x128xbf16, #tpu.memory_space<vmem>>, vector<16x128xbf16>
      tpu.vector_store %arg6[%c0_12, %c0_13], %13 {strides = array<i32>} : memref<16x128xbf16, #tpu.memory_space<vmem>>, vector<16x128xbf16>,
    } else {
    }
    return
  }
  func.func @transform_0(%arg0: i32, %arg1: i32, %arg2: i32) -> (i32, i32) {
    %c0_i32 = arith.constant 0 : i32
    return %arg0, %arg2 : i32, i32
  }
  func.func @transform_1(%arg0: i32, %arg1: i32, %arg2: i32) -> (i32, i32) {
    %c0_i32 = arith.constant 0 : i32
    return %arg2, %arg1 : i32, i32
  }
  func.func @transform_2(%arg0: i32, %arg1: i32, %arg2: i32) -> (i32, i32) {
    %c0_i32 = arith.constant 0 : i32
    %c0_i32_0 = arith.constant 0 : i32
    return %c0_i32, %arg1 : i32, i32
  }
  func.func @transform_3(%arg0: i32, %arg1: i32, %arg2: i32) -> (i32, i32) {
    %c0_i32 = arith.constant 0 : i32
    return %arg0, %arg1 : i32, i32
  }
}

module attributes {stable_mosaic.version = 11 : i64} {
  func.func @_matmul_bias_kernel(%arg0: i32, %arg1: i32, %arg2: i32, %arg3: memref<16x32xbf16, #tpu.memory_space<vmem>>, %arg4: memref<32x128xbf16, #tpu.memory_space<vmem>>, %arg5: memref<1x128xf32, #tpu.memory_space<vmem>>, %arg6: memref<16x128xbf16, #tpu.memory_space<vmem>>, %arg7: memref<16x128xf32, #tpu.memory_space<vmem>>) attributes {dimension_semantics = [#tpu.dimension_semantics<parallel>, #tpu.dimension_semantics<parallel>, #tpu.dimension_semantics<arbitrary>], iteration_bounds = array<i64: 1, 1, 1>, scalar_prefetch = 0 : i64, scratch_operands = 1 : i64, tpu.core_type = #tpu.core_type<tc>, window_params = [{transform_indices = @transform_0, window_bounds = array<i64: 16, 32>}, {transform_indices = @transform_1, window_bounds = array<i64: 32, 128>}, {transform_indices = @transform_2, window_bounds = array<i64: 1, 128>}, {transform_indices = @transform_3, window_bounds = array<i64: 16, 128>}]} {
    %c0_i32 = arith.constant 0 : i32
    %0 = arith.cmpi eq, %arg2, %c0_i32 : i32
    %1 = arith.extui %0 : i1 to i32
    %c0_i32_0 = arith.constant 0 : i32
    %2 = arith.cmpi ne, %1, %c0_i32_0 : i32
    scf.if %2 {
      %c0_10 = arith.constant 0 : index
      %c0_11 = arith.constant 0 : index
      %12 = vector.load %arg5[%c0_10, %c0_11] : memref<1x128xf32, #tpu.memory_space<vmem>>, vector<1x128xf32>
      %13 = vector.shape_cast %12 : vector<1x128xf32> to vector<1x128xf32>
      %14 = vector.broadcast %13 : vector<1x128xf32> to vector<16x128xf32>
      %c0_12 = arith.constant 0 : index
      %c0_13 = arith.constant 0 : index
      %15 = vector.load %arg7[%c0_12, %c0_13] : memref<16x128xf32, #tpu.memory_space<vmem>>, vector<16x128xf32>
      tpu.vector_store %arg7[%c0_12, %c0_13], %14 {strides = array<i32>} : memref<16x128xf32, #tpu.memory_space<vmem>>, vector<16x128xf32>,
    } else {
    }
    %c0 = arith.constant 0 : index
    %c0_1 = arith.constant 0 : index
    %3 = vector.load %arg7[%c0, %c0_1] : memref<16x128xf32, #tpu.memory_space<vmem>>, vector<16x128xf32>
    %c0_2 = arith.constant 0 : index
    %c0_3 = arith.constant 0 : index
    %4 = vector.load %arg3[%c0_2, %c0_3] : memref<16x32xbf16, #tpu.memory_space<vmem>>, vector<16x32xbf16>
    %c0_4 = arith.constant 0 : index
    %c0_5 = arith.constant 0 : index
    %5 = vector.load %arg4[%c0_4, %c0_5] : memref<32x128xbf16, #tpu.memory_space<vmem>>, vector<32x128xbf16>
    %cst = arith.constant dense<0.000000e+00> : vector<16x128xf32>
    %6 = tpu.matmul %4, %5, %cst {dimension_numbers = #tpu.dot_dimension_numbers<[1], [0], [0], [1], [0, 0, 1, 1], [], []>} : vector<16x32xbf16>, vector<32x128xbf16>, vector<16x128xf32> -> vector<16x128xf32>
    %7 = arith.addf %3, %6 : vector<16x128xf32>
    %c0_6 = arith.constant 0 : index
    %c0_7 = arith.constant 0 : index
    %8 = vector.load %arg7[%c0_6, %c0_7] : memref<16x128xf32, #tpu.memory_space<vmem>>, vector<16x128xf32>
    tpu.vector_store %arg7[%c0_6, %c0_7], %7 {strides = array<i32>} : memref<16x128xf32, #tpu.memory_space<vmem>>, vector<16x128xf32>,
    %c0_i32_8 = arith.constant 0 : i32
    %9 = arith.cmpi eq, %arg2, %c0_i32_8 : i32
    %10 = arith.extui %9 : i1 to i32
    %c0_i32_9 = arith.constant 0 : i32
    %11 = arith.cmpi ne, %10, %c0_i32_9 : i32
    scf.if %11 {
      %c0_10 = arith.constant 0 : index
      %c0_11 = arith.constant 0 : index
      %12 = vector.load %arg7[%c0_10, %c0_11] : memref<16x128xf32, #tpu.memory_space<vmem>>, vector<16x128xf32>
      %13 = arith.truncf %12 : vector<16x128xf32> to vector<16x128xbf16>
      %c0_12 = arith.constant 0 : index
      %c0_13 = arith.constant 0 : index
      %14 = vector.load %arg6[%c0_12, %c0_13] : memref<16x128xbf16, #tpu.memory_space<vmem>>, vector<16x128xbf16>
      tpu.vector_store %arg6[%c0_12, %c0_13], %13 {strides = array<i32>} : memref<16x128xbf16, #tpu.memory_space<vmem>>, vector<16x128xbf16>,
    } else {
    }
    return
  }
  func.func @transform_0(%arg0: i32, %arg1: i32, %arg2: i32) -> (i32, i32) {
    %c0_i32 = arith.constant 0 : i32
    return %arg0, %arg2 : i32, i32
  }
  func.func @transform_1(%arg0: i32, %arg1: i32, %arg2: i32) -> (i32, i32) {
    %c0_i32 = arith.constant 0 : i32
    return %arg2, %arg1 : i32, i32
  }
  func.func @transform_2(%arg0: i32, %arg1: i32, %arg2: i32) -> (i32, i32) {
    %c0_i32 = arith.constant 0 : i32
    %c0_i32_0 = arith.constant 0 : i32
    return %c0_i32, %arg1 : i32, i32
  }
  func.func @transform_3(%arg0: i32, %arg1: i32, %arg2: i32) -> (i32, i32) {
    %c0_i32 = arith.constant 0 : i32
    return %arg0, %arg1 : i32, i32
  }
}

module attributes {stable_mosaic.version = 11 : i64} {
  func.func @_matmul_bias_kernel(%arg0: i32, %arg1: i32, %arg2: i32, %arg3: memref<16x32xbf16, #tpu.memory_space<vmem>>, %arg4: memref<32x50xbf16, #tpu.memory_space<vmem>>, %arg5: memref<1x50xf32, #tpu.memory_space<vmem>>, %arg6: memref<16x50xf32, #tpu.memory_space<vmem>>, %arg7: memref<16x50xf32, #tpu.memory_space<vmem>>) attributes {dimension_semantics = [#tpu.dimension_semantics<parallel>, #tpu.dimension_semantics<parallel>, #tpu.dimension_semantics<arbitrary>], iteration_bounds = array<i64: 1, 1, 1>, scalar_prefetch = 0 : i64, scratch_operands = 1 : i64, tpu.core_type = #tpu.core_type<tc>, window_params = [{transform_indices = @transform_0, window_bounds = array<i64: 16, 32>}, {transform_indices = @transform_1, window_bounds = array<i64: 32, 50>}, {transform_indices = @transform_2, window_bounds = array<i64: 1, 50>}, {transform_indices = @transform_3, window_bounds = array<i64: 16, 50>}]} {
    %c0_i32 = arith.constant 0 : i32
    %0 = arith.cmpi eq, %arg2, %c0_i32 : i32
    %1 = arith.extui %0 : i1 to i32
    %c0_i32_0 = arith.constant 0 : i32
    %2 = arith.cmpi ne, %1, %c0_i32_0 : i32
    scf.if %2 {
      %c0_10 = arith.constant 0 : index
      %c0_11 = arith.constant 0 : index
      %12 = vector.load %arg5[%c0_10, %c0_11] : memref<1x50xf32, #tpu.memory_space<vmem>>, vector<1x50xf32>
      %13 = vector.shape_cast %12 : vector<1x50xf32> to vector<1x50xf32>
      %14 = vector.broadcast %13 : vector<1x50xf32> to vector<16x50xf32>
      %c0_12 = arith.constant 0 : index
      %c0_13 = arith.constant 0 : index
      %15 = vector.load %arg7[%c0_12, %c0_13] : memref<16x50xf32, #tpu.memory_space<vmem>>, vector<16x50xf32>
      tpu.vector_store %arg7[%c0_12, %c0_13], %14 {strides = array<i32>} : memref<16x50xf32, #tpu.memory_space<vmem>>, vector<16x50xf32>,
    } else {
    }
    %c0 = arith.constant 0 : index
    %c0_1 = arith.constant 0 : index
    %3 = vector.load %arg7[%c0, %c0_1] : memref<16x50xf32, #tpu.memory_space<vmem>>, vector<16x50xf32>
    %c0_2 = arith.constant 0 : index
    %c0_3 = arith.constant 0 : index
    %4 = vector.load %arg3[%c0_2, %c0_3] : memref<16x32xbf16, #tpu.memory_space<vmem>>, vector<16x32xbf16>
    %c0_4 = arith.constant 0 : index
    %c0_5 = arith.constant 0 : index
    %5 = vector.load %arg4[%c0_4, %c0_5] : memref<32x50xbf16, #tpu.memory_space<vmem>>, vector<32x50xbf16>
    %cst = arith.constant dense<0.000000e+00> : vector<16x50xf32>
    %6 = tpu.matmul %4, %5, %cst {dimension_numbers = #tpu.dot_dimension_numbers<[1], [0], [0], [1], [0, 0, 1, 1], [], []>} : vector<16x32xbf16>, vector<32x50xbf16>, vector<16x50xf32> -> vector<16x50xf32>
    %7 = arith.addf %3, %6 : vector<16x50xf32>
    %c0_6 = arith.constant 0 : index
    %c0_7 = arith.constant 0 : index
    %8 = vector.load %arg7[%c0_6, %c0_7] : memref<16x50xf32, #tpu.memory_space<vmem>>, vector<16x50xf32>
    tpu.vector_store %arg7[%c0_6, %c0_7], %7 {strides = array<i32>} : memref<16x50xf32, #tpu.memory_space<vmem>>, vector<16x50xf32>,
    %c0_i32_8 = arith.constant 0 : i32
    %9 = arith.cmpi eq, %arg2, %c0_i32_8 : i32
    %10 = arith.extui %9 : i1 to i32
    %c0_i32_9 = arith.constant 0 : i32
    %11 = arith.cmpi ne, %10, %c0_i32_9 : i32
    scf.if %11 {
      %c0_10 = arith.constant 0 : index
      %c0_11 = arith.constant 0 : index
      %12 = vector.load %arg7[%c0_10, %c0_11] : memref<16x50xf32, #tpu.memory_space<vmem>>, vector<16x50xf32>
      %c0_12 = arith.constant 0 : index
      %c0_13 = arith.constant 0 : index
      %13 = vector.load %arg6[%c0_12, %c0_13] : memref<16x50xf32, #tpu.memory_space<vmem>>, vector<16x50xf32>
      tpu.vector_store %arg6[%c0_12, %c0_13], %12 {strides = array<i32>} : memref<16x50xf32, #tpu.memory_space<vmem>>, vector<16x50xf32>,
    } else {
    }
    return
  }
  func.func @transform_0(%arg0: i32, %arg1: i32, %arg2: i32) -> (i32, i32) {
    %c0_i32 = arith.constant 0 : i32
    return %arg0, %arg2 : i32, i32
  }
  func.func @transform_1(%arg0: i32, %arg1: i32, %arg2: i32) -> (i32, i32) {
    %c0_i32 = arith.constant 0 : i32
    return %arg2, %arg1 : i32, i32
  }
  func.func @transform_2(%arg0: i32, %arg1: i32, %arg2: i32) -> (i32, i32) {
    %c0_i32 = arith.constant 0 : i32
    %c0_i32_0 = arith.constant 0 : i32
    return %c0_i32, %arg1 : i32, i32
  }
  func.func @transform_3(%arg0: i32, %arg1: i32, %arg2: i32) -> (i32, i32) {
    %c0_i32 = arith.constant 0 : i32
    return %arg0, %arg1 : i32, i32
  }
}

module attributes {stable_mosaic.version = 11 : i64} {
  func.func @_lstm_recurrent_kernel(%arg0: i32, %arg1: memref<8x2x128xbf16, #tpu.memory_space<vmem>>, %arg2: memref<32x128xbf16, #tpu.memory_space<vmem>>, %arg3: memref<2x32xf32, #tpu.memory_space<vmem>>, %arg4: memref<2x32xf32, #tpu.memory_space<vmem>>, %arg5: memref<8x2x32xbf16, #tpu.memory_space<vmem>>, %arg6: memref<2x32xf32, #tpu.memory_space<vmem>>, %arg7: memref<2x32xf32, #tpu.memory_space<vmem>>, %arg8: memref<2x32xf32, #tpu.memory_space<vmem>>, %arg9: memref<2x32xf32, #tpu.memory_space<vmem>>) attributes {dimension_semantics = [#tpu.dimension_semantics<arbitrary>], iteration_bounds = array<i64: 1>, scalar_prefetch = 0 : i64, scratch_operands = 2 : i64, tpu.core_type = #tpu.core_type<tc>, window_params = [{transform_indices = @transform_0, window_bounds = array<i64: 8, 2, 128>}, {pipeline_mode = #tpu.pipeline_mode<synchronous>, transform_indices = @transform_1, window_bounds = array<i64: 32, 128>}, {pipeline_mode = #tpu.pipeline_mode<synchronous>, transform_indices = @transform_2, window_bounds = array<i64: 2, 32>}, {pipeline_mode = #tpu.pipeline_mode<synchronous>, transform_indices = @transform_3, window_bounds = array<i64: 2, 32>}, {transform_indices = @transform_4, window_bounds = array<i64: 8, 2, 32>}, {pipeline_mode = #tpu.pipeline_mode<synchronous>, transform_indices = @transform_5, window_bounds = array<i64: 2, 32>}, {pipeline_mode = #tpu.pipeline_mode<synchronous>, transform_indices = @transform_6, window_bounds = array<i64: 2, 32>}]} {
    %c0_i32 = arith.constant 0 : i32
    %0 = arith.cmpi eq, %arg0, %c0_i32 : i32
    %1 = arith.extui %0 : i1 to i32
    %c0_i32_0 = arith.constant 0 : i32
    %2 = arith.cmpi ne, %1, %c0_i32_0 : i32
    scf.if %2 {
      %c0_68 = arith.constant 0 : index
      %c0_69 = arith.constant 0 : index
      %275 = vector.load %arg3[%c0_68, %c0_69] : memref<2x32xf32, #tpu.memory_space<vmem>>, vector<2x32xf32>
      %c0_70 = arith.constant 0 : index
      %c0_71 = arith.constant 0 : index
      %276 = vector.load %arg8[%c0_70, %c0_71] : memref<2x32xf32, #tpu.memory_space<vmem>>, vector<2x32xf32>
      tpu.vector_store %arg8[%c0_70, %c0_71], %275 {strides = array<i32>} : memref<2x32xf32, #tpu.memory_space<vmem>>, vector<2x32xf32>,
      %c0_72 = arith.constant 0 : index
      %c0_73 = arith.constant 0 : index
      %277 = vector.load %arg4[%c0_72, %c0_73] : memref<2x32xf32, #tpu.memory_space<vmem>>, vector<2x32xf32>
      %c0_74 = arith.constant 0 : index
      %c0_75 = arith.constant 0 : index
      %278 = vector.load %arg9[%c0_74, %c0_75] : memref<2x32xf32, #tpu.memory_space<vmem>>, vector<2x32xf32>
      tpu.vector_store %arg9[%c0_74, %c0_75], %277 {strides = array<i32>} : memref<2x32xf32, #tpu.memory_space<vmem>>, vector<2x32xf32>,
    } else {
    }
    %c0 = arith.constant 0 : index
    %c0_1 = arith.constant 0 : index
    %3 = vector.load %arg2[%c0, %c0_1] : memref<32x128xbf16, #tpu.memory_space<vmem>>, vector<32x128xbf16>
    %c0_2 = arith.constant 0 : index
    %c0_3 = arith.constant 0 : index
    %4 = vector.load %arg8[%c0_2, %c0_3] : memref<2x32xf32, #tpu.memory_space<vmem>>, vector<2x32xf32>
    %c0_4 = arith.constant 0 : index
    %c0_5 = arith.constant 0 : index
    %5 = vector.load %arg9[%c0_4, %c0_5] : memref<2x32xf32, #tpu.memory_space<vmem>>, vector<2x32xf32>
    %c0_i32_6 = arith.constant 0 : i32
    %6 = arith.index_cast %c0_i32_6 : i32 to index
    %c0_7 = arith.constant 0 : index
    %c0_8 = arith.constant 0 : index
    %7 = vector.load %arg1[%6, %c0_7, %c0_8] : memref<8x2x128xbf16, #tpu.memory_space<vmem>>, vector<1x2x128xbf16>
    %8 = vector.shape_cast %7 : vector<1x2x128xbf16> to vector<2x128xbf16>
    %9 = arith.extf %8 : vector<2x128xbf16> to vector<2x128xf32>
    %10 = arith.truncf %4 : vector<2x32xf32> to vector<2x32xbf16>
    %cst = arith.constant dense<0.000000e+00> : vector<2x128xf32>
    %11 = tpu.matmul %10, %3, %cst {dimension_numbers = #tpu.dot_dimension_numbers<[1], [0], [0], [1], [0, 0, 1, 1], [], []>} : vector<2x32xbf16>, vector<32x128xbf16>, vector<2x128xf32> -> vector<2x128xf32>
    %12 = arith.addf %9, %11 : vector<2x128xf32>
    %13 = vector.extract_strided_slice %12 {offsets = [0, 0], sizes = [2, 64], strides = [1, 1]} : vector<2x128xf32> to vector<2x64xf32>
    %14 = arith.negf %13 : vector<2x64xf32>
    %15 = math.exp %14 : vector<2x64xf32>
    %cst_9 = arith.constant 1.000000e+00 : f32
    %16 = vector.broadcast %cst_9 : f32 to vector<2x64xf32>
    %17 = arith.addf %16, %15 : vector<2x64xf32>
    %18 = arith.divf %16, %17 : vector<2x64xf32>
    %19 = vector.extract_strided_slice %12 {offsets = [0, 64], sizes = [2, 32], strides = [1, 1]} : vector<2x128xf32> to vector<2x32xf32>
    %20 = math.tanh %19 : vector<2x32xf32>
    %21 = vector.extract_strided_slice %12 {offsets = [0, 96], sizes = [2, 32], strides = [1, 1]} : vector<2x128xf32> to vector<2x32xf32>
    %22 = arith.negf %21 : vector<2x32xf32>
    %23 = math.exp %22 : vector<2x32xf32>
    %cst_10 = arith.constant 1.000000e+00 : f32
    %24 = vector.broadcast %cst_10 : f32 to vector<2x32xf32>
    %25 = arith.addf %24, %23 : vector<2x32xf32>
    %26 = arith.divf %24, %25 : vector<2x32xf32>
    %27 = vector.extract_strided_slice %18 {offsets = [0, 32], sizes = [2, 32], strides = [1, 1]} : vector<2x64xf32> to vector<2x32xf32>
    %28 = arith.mulf %27, %5 : vector<2x32xf32>
    %29 = vector.extract_strided_slice %18 {offsets = [0, 0], sizes = [2, 32], strides = [1, 1]} : vector<2x64xf32> to vector<2x32xf32>
    %30 = arith.mulf %29, %20 : vector<2x32xf32>
    %31 = arith.addf %28, %30 : vector<2x32xf32>
    %32 = math.tanh %31 : vector<2x32xf32>
    %33 = arith.mulf %26, %32 : vector<2x32xf32>
    %34 = arith.truncf %33 : vector<2x32xf32> to vector<2x32xbf16>
    %35 = arith.index_cast %c0_i32_6 : i32 to index
    %c0_11 = arith.constant 0 : index
    %c0_12 = arith.constant 0 : index
    %36 = vector.load %arg5[%35, %c0_11, %c0_12] : memref<8x2x32xbf16, #tpu.memory_space<vmem>>, vector<1x2x32xbf16>
    %37 = vector.shape_cast %36 : vector<1x2x32xbf16> to vector<2x32xbf16>
    %38 = vector.shape_cast %34 : vector<2x32xbf16> to vector<1x2x32xbf16>
    tpu.vector_store %arg5[%35, %c0_11, %c0_12], %38 {strides = array<i32>} : memref<8x2x32xbf16, #tpu.memory_space<vmem>>, vector<1x2x32xbf16>,
    %c1_i32 = arith.constant 1 : i32
    %39 = arith.index_cast %c1_i32 : i32 to index
    %c0_13 = arith.constant 0 : index
    %c0_14 = arith.constant 0 : index
    %40 = vector.load %arg1[%39, %c0_13, %c0_14] : memref<8x2x128xbf16, #tpu.memory_space<vmem>>, vector<1x2x128xbf16>
    %41 = vector.shape_cast %40 : vector<1x2x128xbf16> to vector<2x128xbf16>
    %42 = arith.extf %41 : vector<2x128xbf16> to vector<2x128xf32>
    %43 = arith.truncf %33 : vector<2x32xf32> to vector<2x32xbf16>
    %cst_15 = arith.constant dense<0.000000e+00> : vector<2x128xf32>
    %44 = tpu.matmul %43, %3, %cst_15 {dimension_numbers = #tpu.dot_dimension_numbers<[1], [0], [0], [1], [0, 0, 1, 1], [], []>} : vector<2x32xbf16>, vector<32x128xbf16>, vector<2x128xf32> -> vector<2x128xf32>
    %45 = arith.addf %42, %44 : vector<2x128xf32>
    %46 = vector.extract_strided_slice %45 {offsets = [0, 0], sizes = [2, 64], strides = [1, 1]} : vector<2x128xf32> to vector<2x64xf32>
    %47 = arith.negf %46 : vector<2x64xf32>
    %48 = math.exp %47 : vector<2x64xf32>
    %cst_16 = arith.constant 1.000000e+00 : f32
    %49 = vector.broadcast %cst_16 : f32 to vector<2x64xf32>
    %50 = arith.addf %49, %48 : vector<2x64xf32>
    %51 = arith.divf %49, %50 : vector<2x64xf32>
    %52 = vector.extract_strided_slice %45 {offsets = [0, 64], sizes = [2, 32], strides = [1, 1]} : vector<2x128xf32> to vector<2x32xf32>
    %53 = math.tanh %52 : vector<2x32xf32>
    %54 = vector.extract_strided_slice %45 {offsets = [0, 96], sizes = [2, 32], strides = [1, 1]} : vector<2x128xf32> to vector<2x32xf32>
    %55 = arith.negf %54 : vector<2x32xf32>
    %56 = math.exp %55 : vector<2x32xf32>
    %cst_17 = arith.constant 1.000000e+00 : f32
    %57 = vector.broadcast %cst_17 : f32 to vector<2x32xf32>
    %58 = arith.addf %57, %56 : vector<2x32xf32>
    %59 = arith.divf %57, %58 : vector<2x32xf32>
    %60 = vector.extract_strided_slice %51 {offsets = [0, 32], sizes = [2, 32], strides = [1, 1]} : vector<2x64xf32> to vector<2x32xf32>
    %61 = arith.mulf %60, %31 : vector<2x32xf32>
    %62 = vector.extract_strided_slice %51 {offsets = [0, 0], sizes = [2, 32], strides = [1, 1]} : vector<2x64xf32> to vector<2x32xf32>
    %63 = arith.mulf %62, %53 : vector<2x32xf32>
    %64 = arith.addf %61, %63 : vector<2x32xf32>
    %65 = math.tanh %64 : vector<2x32xf32>
    %66 = arith.mulf %59, %65 : vector<2x32xf32>
    %67 = arith.truncf %66 : vector<2x32xf32> to vector<2x32xbf16>
    %68 = arith.index_cast %c1_i32 : i32 to index
    %c0_18 = arith.constant 0 : index
    %c0_19 = arith.constant 0 : index
    %69 = vector.load %arg5[%68, %c0_18, %c0_19] : memref<8x2x32xbf16, #tpu.memory_space<vmem>>, vector<1x2x32xbf16>
    %70 = vector.shape_cast %69 : vector<1x2x32xbf16> to vector<2x32xbf16>
    %71 = vector.shape_cast %67 : vector<2x32xbf16> to vector<1x2x32xbf16>
    tpu.vector_store %arg5[%68, %c0_18, %c0_19], %71 {strides = array<i32>} : memref<8x2x32xbf16, #tpu.memory_space<vmem>>, vector<1x2x32xbf16>,
    %c2_i32 = arith.constant 2 : i32
    %72 = arith.index_cast %c2_i32 : i32 to index
    %c0_20 = arith.constant 0 : index
    %c0_21 = arith.constant 0 : index
    %73 = vector.load %arg1[%72, %c0_20, %c0_21] : memref<8x2x128xbf16, #tpu.memory_space<vmem>>, vector<1x2x128xbf16>
    %74 = vector.shape_cast %73 : vector<1x2x128xbf16> to vector<2x128xbf16>
    %75 = arith.extf %74 : vector<2x128xbf16> to vector<2x128xf32>
    %76 = arith.truncf %66 : vector<2x32xf32> to vector<2x32xbf16>
    %cst_22 = arith.constant dense<0.000000e+00> : vector<2x128xf32>
    %77 = tpu.matmul %76, %3, %cst_22 {dimension_numbers = #tpu.dot_dimension_numbers<[1], [0], [0], [1], [0, 0, 1, 1], [], []>} : vector<2x32xbf16>, vector<32x128xbf16>, vector<2x128xf32> -> vector<2x128xf32>
    %78 = arith.addf %75, %77 : vector<2x128xf32>
    %79 = vector.extract_strided_slice %78 {offsets = [0, 0], sizes = [2, 64], strides = [1, 1]} : vector<2x128xf32> to vector<2x64xf32>
    %80 = arith.negf %79 : vector<2x64xf32>
    %81 = math.exp %80 : vector<2x64xf32>
    %cst_23 = arith.constant 1.000000e+00 : f32
    %82 = vector.broadcast %cst_23 : f32 to vector<2x64xf32>
    %83 = arith.addf %82, %81 : vector<2x64xf32>
    %84 = arith.divf %82, %83 : vector<2x64xf32>
    %85 = vector.extract_strided_slice %78 {offsets = [0, 64], sizes = [2, 32], strides = [1, 1]} : vector<2x128xf32> to vector<2x32xf32>
    %86 = math.tanh %85 : vector<2x32xf32>
    %87 = vector.extract_strided_slice %78 {offsets = [0, 96], sizes = [2, 32], strides = [1, 1]} : vector<2x128xf32> to vector<2x32xf32>
    %88 = arith.negf %87 : vector<2x32xf32>
    %89 = math.exp %88 : vector<2x32xf32>
    %cst_24 = arith.constant 1.000000e+00 : f32
    %90 = vector.broadcast %cst_24 : f32 to vector<2x32xf32>
    %91 = arith.addf %90, %89 : vector<2x32xf32>
    %92 = arith.divf %90, %91 : vector<2x32xf32>
    %93 = vector.extract_strided_slice %84 {offsets = [0, 32], sizes = [2, 32], strides = [1, 1]} : vector<2x64xf32> to vector<2x32xf32>
    %94 = arith.mulf %93, %64 : vector<2x32xf32>
    %95 = vector.extract_strided_slice %84 {offsets = [0, 0], sizes = [2, 32], strides = [1, 1]} : vector<2x64xf32> to vector<2x32xf32>
    %96 = arith.mulf %95, %86 : vector<2x32xf32>
    %97 = arith.addf %94, %96 : vector<2x32xf32>
    %98 = math.tanh %97 : vector<2x32xf32>
    %99 = arith.mulf %92, %98 : vector<2x32xf32>
    %100 = arith.truncf %99 : vector<2x32xf32> to vector<2x32xbf16>
    %101 = arith.index_cast %c2_i32 : i32 to index
    %c0_25 = arith.constant 0 : index
    %c0_26 = arith.constant 0 : index
    %102 = vector.load %arg5[%101, %c0_25, %c0_26] : memref<8x2x32xbf16, #tpu.memory_space<vmem>>, vector<1x2x32xbf16>
    %103 = vector.shape_cast %102 : vector<1x2x32xbf16> to vector<2x32xbf16>
    %104 = vector.shape_cast %100 : vector<2x32xbf16> to vector<1x2x32xbf16>
    tpu.vector_store %arg5[%101, %c0_25, %c0_26], %104 {strides = array<i32>} : memref<8x2x32xbf16, #tpu.memory_space<vmem>>, vector<1x2x32xbf16>,
    %c3_i32 = arith.constant 3 : i32
    %105 = arith.index_cast %c3_i32 : i32 to index
    %c0_27 = arith.constant 0 : index
    %c0_28 = arith.constant 0 : index
    %106 = vector.load %arg1[%105, %c0_27, %c0_28] : memref<8x2x128xbf16, #tpu.memory_space<vmem>>, vector<1x2x128xbf16>
    %107 = vector.shape_cast %106 : vector<1x2x128xbf16> to vector<2x128xbf16>
    %108 = arith.extf %107 : vector<2x128xbf16> to vector<2x128xf32>
    %109 = arith.truncf %99 : vector<2x32xf32> to vector<2x32xbf16>
    %cst_29 = arith.constant dense<0.000000e+00> : vector<2x128xf32>
    %110 = tpu.matmul %109, %3, %cst_29 {dimension_numbers = #tpu.dot_dimension_numbers<[1], [0], [0], [1], [0, 0, 1, 1], [], []>} : vector<2x32xbf16>, vector<32x128xbf16>, vector<2x128xf32> -> vector<2x128xf32>
    %111 = arith.addf %108, %110 : vector<2x128xf32>
    %112 = vector.extract_strided_slice %111 {offsets = [0, 0], sizes = [2, 64], strides = [1, 1]} : vector<2x128xf32> to vector<2x64xf32>
    %113 = arith.negf %112 : vector<2x64xf32>
    %114 = math.exp %113 : vector<2x64xf32>
    %cst_30 = arith.constant 1.000000e+00 : f32
    %115 = vector.broadcast %cst_30 : f32 to vector<2x64xf32>
    %116 = arith.addf %115, %114 : vector<2x64xf32>
    %117 = arith.divf %115, %116 : vector<2x64xf32>
    %118 = vector.extract_strided_slice %111 {offsets = [0, 64], sizes = [2, 32], strides = [1, 1]} : vector<2x128xf32> to vector<2x32xf32>
    %119 = math.tanh %118 : vector<2x32xf32>
    %120 = vector.extract_strided_slice %111 {offsets = [0, 96], sizes = [2, 32], strides = [1, 1]} : vector<2x128xf32> to vector<2x32xf32>
    %121 = arith.negf %120 : vector<2x32xf32>
    %122 = math.exp %121 : vector<2x32xf32>
    %cst_31 = arith.constant 1.000000e+00 : f32
    %123 = vector.broadcast %cst_31 : f32 to vector<2x32xf32>
    %124 = arith.addf %123, %122 : vector<2x32xf32>
    %125 = arith.divf %123, %124 : vector<2x32xf32>
    %126 = vector.extract_strided_slice %117 {offsets = [0, 32], sizes = [2, 32], strides = [1, 1]} : vector<2x64xf32> to vector<2x32xf32>
    %127 = arith.mulf %126, %97 : vector<2x32xf32>
    %128 = vector.extract_strided_slice %117 {offsets = [0, 0], sizes = [2, 32], strides = [1, 1]} : vector<2x64xf32> to vector<2x32xf32>
    %129 = arith.mulf %128, %119 : vector<2x32xf32>
    %130 = arith.addf %127, %129 : vector<2x32xf32>
    %131 = math.tanh %130 : vector<2x32xf32>
    %132 = arith.mulf %125, %131 : vector<2x32xf32>
    %133 = arith.truncf %132 : vector<2x32xf32> to vector<2x32xbf16>
    %134 = arith.index_cast %c3_i32 : i32 to index
    %c0_32 = arith.constant 0 : index
    %c0_33 = arith.constant 0 : index
    %135 = vector.load %arg5[%134, %c0_32, %c0_33] : memref<8x2x32xbf16, #tpu.memory_space<vmem>>, vector<1x2x32xbf16>
    %136 = vector.shape_cast %135 : vector<1x2x32xbf16> to vector<2x32xbf16>
    %137 = vector.shape_cast %133 : vector<2x32xbf16> to vector<1x2x32xbf16>
    tpu.vector_store %arg5[%134, %c0_32, %c0_33], %137 {strides = array<i32>} : memref<8x2x32xbf16, #tpu.memory_space<vmem>>, vector<1x2x32xbf16>,
    %c4_i32 = arith.constant 4 : i32
    %138 = arith.index_cast %c4_i32 : i32 to index
    %c0_34 = arith.constant 0 : index
    %c0_35 = arith.constant 0 : index
    %139 = vector.load %arg1[%138, %c0_34, %c0_35] : memref<8x2x128xbf16, #tpu.memory_space<vmem>>, vector<1x2x128xbf16>
    %140 = vector.shape_cast %139 : vector<1x2x128xbf16> to vector<2x128xbf16>
    %141 = arith.extf %140 : vector<2x128xbf16> to vector<2x128xf32>
    %142 = arith.truncf %132 : vector<2x32xf32> to vector<2x32xbf16>
    %cst_36 = arith.constant dense<0.000000e+00> : vector<2x128xf32>
    %143 = tpu.matmul %142, %3, %cst_36 {dimension_numbers = #tpu.dot_dimension_numbers<[1], [0], [0], [1], [0, 0, 1, 1], [], []>} : vector<2x32xbf16>, vector<32x128xbf16>, vector<2x128xf32> -> vector<2x128xf32>
    %144 = arith.addf %141, %143 : vector<2x128xf32>
    %145 = vector.extract_strided_slice %144 {offsets = [0, 0], sizes = [2, 64], strides = [1, 1]} : vector<2x128xf32> to vector<2x64xf32>
    %146 = arith.negf %145 : vector<2x64xf32>
    %147 = math.exp %146 : vector<2x64xf32>
    %cst_37 = arith.constant 1.000000e+00 : f32
    %148 = vector.broadcast %cst_37 : f32 to vector<2x64xf32>
    %149 = arith.addf %148, %147 : vector<2x64xf32>
    %150 = arith.divf %148, %149 : vector<2x64xf32>
    %151 = vector.extract_strided_slice %144 {offsets = [0, 64], sizes = [2, 32], strides = [1, 1]} : vector<2x128xf32> to vector<2x32xf32>
    %152 = math.tanh %151 : vector<2x32xf32>
    %153 = vector.extract_strided_slice %144 {offsets = [0, 96], sizes = [2, 32], strides = [1, 1]} : vector<2x128xf32> to vector<2x32xf32>
    %154 = arith.negf %153 : vector<2x32xf32>
    %155 = math.exp %154 : vector<2x32xf32>
    %cst_38 = arith.constant 1.000000e+00 : f32
    %156 = vector.broadcast %cst_38 : f32 to vector<2x32xf32>
    %157 = arith.addf %156, %155 : vector<2x32xf32>
    %158 = arith.divf %156, %157 : vector<2x32xf32>
    %159 = vector.extract_strided_slice %150 {offsets = [0, 32], sizes = [2, 32], strides = [1, 1]} : vector<2x64xf32> to vector<2x32xf32>
    %160 = arith.mulf %159, %130 : vector<2x32xf32>
    %161 = vector.extract_strided_slice %150 {offsets = [0, 0], sizes = [2, 32], strides = [1, 1]} : vector<2x64xf32> to vector<2x32xf32>
    %162 = arith.mulf %161, %152 : vector<2x32xf32>
    %163 = arith.addf %160, %162 : vector<2x32xf32>
    %164 = math.tanh %163 : vector<2x32xf32>
    %165 = arith.mulf %158, %164 : vector<2x32xf32>
    %166 = arith.truncf %165 : vector<2x32xf32> to vector<2x32xbf16>
    %167 = arith.index_cast %c4_i32 : i32 to index
    %c0_39 = arith.constant 0 : index
    %c0_40 = arith.constant 0 : index
    %168 = vector.load %arg5[%167, %c0_39, %c0_40] : memref<8x2x32xbf16, #tpu.memory_space<vmem>>, vector<1x2x32xbf16>
    %169 = vector.shape_cast %168 : vector<1x2x32xbf16> to vector<2x32xbf16>
    %170 = vector.shape_cast %166 : vector<2x32xbf16> to vector<1x2x32xbf16>
    tpu.vector_store %arg5[%167, %c0_39, %c0_40], %170 {strides = array<i32>} : memref<8x2x32xbf16, #tpu.memory_space<vmem>>, vector<1x2x32xbf16>,
    %c5_i32 = arith.constant 5 : i32
    %171 = arith.index_cast %c5_i32 : i32 to index
    %c0_41 = arith.constant 0 : index
    %c0_42 = arith.constant 0 : index
    %172 = vector.load %arg1[%171, %c0_41, %c0_42] : memref<8x2x128xbf16, #tpu.memory_space<vmem>>, vector<1x2x128xbf16>
    %173 = vector.shape_cast %172 : vector<1x2x128xbf16> to vector<2x128xbf16>
    %174 = arith.extf %173 : vector<2x128xbf16> to vector<2x128xf32>
    %175 = arith.truncf %165 : vector<2x32xf32> to vector<2x32xbf16>
    %cst_43 = arith.constant dense<0.000000e+00> : vector<2x128xf32>
    %176 = tpu.matmul %175, %3, %cst_43 {dimension_numbers = #tpu.dot_dimension_numbers<[1], [0], [0], [1], [0, 0, 1, 1], [], []>} : vector<2x32xbf16>, vector<32x128xbf16>, vector<2x128xf32> -> vector<2x128xf32>
    %177 = arith.addf %174, %176 : vector<2x128xf32>
    %178 = vector.extract_strided_slice %177 {offsets = [0, 0], sizes = [2, 64], strides = [1, 1]} : vector<2x128xf32> to vector<2x64xf32>
    %179 = arith.negf %178 : vector<2x64xf32>
    %180 = math.exp %179 : vector<2x64xf32>
    %cst_44 = arith.constant 1.000000e+00 : f32
    %181 = vector.broadcast %cst_44 : f32 to vector<2x64xf32>
    %182 = arith.addf %181, %180 : vector<2x64xf32>
    %183 = arith.divf %181, %182 : vector<2x64xf32>
    %184 = vector.extract_strided_slice %177 {offsets = [0, 64], sizes = [2, 32], strides = [1, 1]} : vector<2x128xf32> to vector<2x32xf32>
    %185 = math.tanh %184 : vector<2x32xf32>
    %186 = vector.extract_strided_slice %177 {offsets = [0, 96], sizes = [2, 32], strides = [1, 1]} : vector<2x128xf32> to vector<2x32xf32>
    %187 = arith.negf %186 : vector<2x32xf32>
    %188 = math.exp %187 : vector<2x32xf32>
    %cst_45 = arith.constant 1.000000e+00 : f32
    %189 = vector.broadcast %cst_45 : f32 to vector<2x32xf32>
    %190 = arith.addf %189, %188 : vector<2x32xf32>
    %191 = arith.divf %189, %190 : vector<2x32xf32>
    %192 = vector.extract_strided_slice %183 {offsets = [0, 32], sizes = [2, 32], strides = [1, 1]} : vector<2x64xf32> to vector<2x32xf32>
    %193 = arith.mulf %192, %163 : vector<2x32xf32>
    %194 = vector.extract_strided_slice %183 {offsets = [0, 0], sizes = [2, 32], strides = [1, 1]} : vector<2x64xf32> to vector<2x32xf32>
    %195 = arith.mulf %194, %185 : vector<2x32xf32>
    %196 = arith.addf %193, %195 : vector<2x32xf32>
    %197 = math.tanh %196 : vector<2x32xf32>
    %198 = arith.mulf %191, %197 : vector<2x32xf32>
    %199 = arith.truncf %198 : vector<2x32xf32> to vector<2x32xbf16>
    %200 = arith.index_cast %c5_i32 : i32 to index
    %c0_46 = arith.constant 0 : index
    %c0_47 = arith.constant 0 : index
    %201 = vector.load %arg5[%200, %c0_46, %c0_47] : memref<8x2x32xbf16, #tpu.memory_space<vmem>>, vector<1x2x32xbf16>
    %202 = vector.shape_cast %201 : vector<1x2x32xbf16> to vector<2x32xbf16>
    %203 = vector.shape_cast %199 : vector<2x32xbf16> to vector<1x2x32xbf16>
    tpu.vector_store %arg5[%200, %c0_46, %c0_47], %203 {strides = array<i32>} : memref<8x2x32xbf16, #tpu.memory_space<vmem>>, vector<1x2x32xbf16>,
    %c6_i32 = arith.constant 6 : i32
    %204 = arith.index_cast %c6_i32 : i32 to index
    %c0_48 = arith.constant 0 : index
    %c0_49 = arith.constant 0 : index
    %205 = vector.load %arg1[%204, %c0_48, %c0_49] : memref<8x2x128xbf16, #tpu.memory_space<vmem>>, vector<1x2x128xbf16>
    %206 = vector.shape_cast %205 : vector<1x2x128xbf16> to vector<2x128xbf16>
    %207 = arith.extf %206 : vector<2x128xbf16> to vector<2x128xf32>
    %208 = arith.truncf %198 : vector<2x32xf32> to vector<2x32xbf16>
    %cst_50 = arith.constant dense<0.000000e+00> : vector<2x128xf32>
    %209 = tpu.matmul %208, %3, %cst_50 {dimension_numbers = #tpu.dot_dimension_numbers<[1], [0], [0], [1], [0, 0, 1, 1], [], []>} : vector<2x32xbf16>, vector<32x128xbf16>, vector<2x128xf32> -> vector<2x128xf32>
    %210 = arith.addf %207, %209 : vector<2x128xf32>
    %211 = vector.extract_strided_slice %210 {offsets = [0, 0], sizes = [2, 64], strides = [1, 1]} : vector<2x128xf32> to vector<2x64xf32>
    %212 = arith.negf %211 : vector<2x64xf32>
    %213 = math.exp %212 : vector<2x64xf32>
    %cst_51 = arith.constant 1.000000e+00 : f32
    %214 = vector.broadcast %cst_51 : f32 to vector<2x64xf32>
    %215 = arith.addf %214, %213 : vector<2x64xf32>
    %216 = arith.divf %214, %215 : vector<2x64xf32>
    %217 = vector.extract_strided_slice %210 {offsets = [0, 64], sizes = [2, 32], strides = [1, 1]} : vector<2x128xf32> to vector<2x32xf32>
    %218 = math.tanh %217 : vector<2x32xf32>
    %219 = vector.extract_strided_slice %210 {offsets = [0, 96], sizes = [2, 32], strides = [1, 1]} : vector<2x128xf32> to vector<2x32xf32>
    %220 = arith.negf %219 : vector<2x32xf32>
    %221 = math.exp %220 : vector<2x32xf32>
    %cst_52 = arith.constant 1.000000e+00 : f32
    %222 = vector.broadcast %cst_52 : f32 to vector<2x32xf32>
    %223 = arith.addf %222, %221 : vector<2x32xf32>
    %224 = arith.divf %222, %223 : vector<2x32xf32>
    %225 = vector.extract_strided_slice %216 {offsets = [0, 32], sizes = [2, 32], strides = [1, 1]} : vector<2x64xf32> to vector<2x32xf32>
    %226 = arith.mulf %225, %196 : vector<2x32xf32>
    %227 = vector.extract_strided_slice %216 {offsets = [0, 0], sizes = [2, 32], strides = [1, 1]} : vector<2x64xf32> to vector<2x32xf32>
    %228 = arith.mulf %227, %218 : vector<2x32xf32>
    %229 = arith.addf %226, %228 : vector<2x32xf32>
    %230 = math.tanh %229 : vector<2x32xf32>
    %231 = arith.mulf %224, %230 : vector<2x32xf32>
    %232 = arith.truncf %231 : vector<2x32xf32> to vector<2x32xbf16>
    %233 = arith.index_cast %c6_i32 : i32 to index
    %c0_53 = arith.constant 0 : index
    %c0_54 = arith.constant 0 : index
    %234 = vector.load %arg5[%233, %c0_53, %c0_54] : memref<8x2x32xbf16, #tpu.memory_space<vmem>>, vector<1x2x32xbf16>
    %235 = vector.shape_cast %234 : vector<1x2x32xbf16> to vector<2x32xbf16>
    %236 = vector.shape_cast %232 : vector<2x32xbf16> to vector<1x2x32xbf16>
    tpu.vector_store %arg5[%233, %c0_53, %c0_54], %236 {strides = array<i32>} : memref<8x2x32xbf16, #tpu.memory_space<vmem>>, vector<1x2x32xbf16>,
    %c7_i32 = arith.constant 7 : i32
    %237 = arith.index_cast %c7_i32 : i32 to index
    %c0_55 = arith.constant 0 : index
    %c0_56 = arith.constant 0 : index
    %238 = vector.load %arg1[%237, %c0_55, %c0_56] : memref<8x2x128xbf16, #tpu.memory_space<vmem>>, vector<1x2x128xbf16>
    %239 = vector.shape_cast %238 : vector<1x2x128xbf16> to vector<2x128xbf16>
    %240 = arith.extf %239 : vector<2x128xbf16> to vector<2x128xf32>
    %241 = arith.truncf %231 : vector<2x32xf32> to vector<2x32xbf16>
    %cst_57 = arith.constant dense<0.000000e+00> : vector<2x128xf32>
    %242 = tpu.matmul %241, %3, %cst_57 {dimension_numbers = #tpu.dot_dimension_numbers<[1], [0], [0], [1], [0, 0, 1, 1], [], []>} : vector<2x32xbf16>, vector<32x128xbf16>, vector<2x128xf32> -> vector<2x128xf32>
    %243 = arith.addf %240, %242 : vector<2x128xf32>
    %244 = vector.extract_strided_slice %243 {offsets = [0, 0], sizes = [2, 64], strides = [1, 1]} : vector<2x128xf32> to vector<2x64xf32>
    %245 = arith.negf %244 : vector<2x64xf32>
    %246 = math.exp %245 : vector<2x64xf32>
    %cst_58 = arith.constant 1.000000e+00 : f32
    %247 = vector.broadcast %cst_58 : f32 to vector<2x64xf32>
    %248 = arith.addf %247, %246 : vector<2x64xf32>
    %249 = arith.divf %247, %248 : vector<2x64xf32>
    %250 = vector.extract_strided_slice %243 {offsets = [0, 64], sizes = [2, 32], strides = [1, 1]} : vector<2x128xf32> to vector<2x32xf32>
    %251 = math.tanh %250 : vector<2x32xf32>
    %252 = vector.extract_strided_slice %243 {offsets = [0, 96], sizes = [2, 32], strides = [1, 1]} : vector<2x128xf32> to vector<2x32xf32>
    %253 = arith.negf %252 : vector<2x32xf32>
    %254 = math.exp %253 : vector<2x32xf32>
    %cst_59 = arith.constant 1.000000e+00 : f32
    %255 = vector.broadcast %cst_59 : f32 to vector<2x32xf32>
    %256 = arith.addf %255, %254 : vector<2x32xf32>
    %257 = arith.divf %255, %256 : vector<2x32xf32>
    %258 = vector.extract_strided_slice %249 {offsets = [0, 32], sizes = [2, 32], strides = [1, 1]} : vector<2x64xf32> to vector<2x32xf32>
    %259 = arith.mulf %258, %229 : vector<2x32xf32>
    %260 = vector.extract_strided_slice %249 {offsets = [0, 0], sizes = [2, 32], strides = [1, 1]} : vector<2x64xf32> to vector<2x32xf32>
    %261 = arith.mulf %260, %251 : vector<2x32xf32>
    %262 = arith.addf %259, %261 : vector<2x32xf32>
    %263 = math.tanh %262 : vector<2x32xf32>
    %264 = arith.mulf %257, %263 : vector<2x32xf32>
    %265 = arith.truncf %264 : vector<2x32xf32> to vector<2x32xbf16>
    %266 = arith.index_cast %c7_i32 : i32 to index
    %c0_60 = arith.constant 0 : index
    %c0_61 = arith.constant 0 : index
    %267 = vector.load %arg5[%266, %c0_60, %c0_61] : memref<8x2x32xbf16, #tpu.memory_space<vmem>>, vector<1x2x32xbf16>
    %268 = vector.shape_cast %267 : vector<1x2x32xbf16> to vector<2x32xbf16>
    %269 = vector.shape_cast %265 : vector<2x32xbf16> to vector<1x2x32xbf16>
    tpu.vector_store %arg5[%266, %c0_60, %c0_61], %269 {strides = array<i32>} : memref<8x2x32xbf16, #tpu.memory_space<vmem>>, vector<1x2x32xbf16>,
    %c8_i32 = arith.constant 8 : i32
    %c0_62 = arith.constant 0 : index
    %c0_63 = arith.constant 0 : index
    %270 = vector.load %arg8[%c0_62, %c0_63] : memref<2x32xf32, #tpu.memory_space<vmem>>, vector<2x32xf32>
    tpu.vector_store %arg8[%c0_62, %c0_63], %264 {strides = array<i32>} : memref<2x32xf32, #tpu.memory_space<vmem>>, vector<2x32xf32>,
    %c0_64 = arith.constant 0 : index
    %c0_65 = arith.constant 0 : index
    %271 = vector.load %arg9[%c0_64, %c0_65] : memref<2x32xf32, #tpu.memory_space<vmem>>, vector<2x32xf32>
    tpu.vector_store %arg9[%c0_64, %c0_65], %262 {strides = array<i32>} : memref<2x32xf32, #tpu.memory_space<vmem>>, vector<2x32xf32>,
    %c0_i32_66 = arith.constant 0 : i32
    %272 = arith.cmpi eq, %arg0, %c0_i32_66 : i32
    %273 = arith.extui %272 : i1 to i32
    %c0_i32_67 = arith.constant 0 : i32
    %274 = arith.cmpi ne, %273, %c0_i32_67 : i32
    scf.if %274 {
      %c0_68 = arith.constant 0 : index
      %c0_69 = arith.constant 0 : index
      %275 = vector.load %arg6[%c0_68, %c0_69] : memref<2x32xf32, #tpu.memory_space<vmem>>, vector<2x32xf32>
      tpu.vector_store %arg6[%c0_68, %c0_69], %264 {strides = array<i32>} : memref<2x32xf32, #tpu.memory_space<vmem>>, vector<2x32xf32>,
      %c0_70 = arith.constant 0 : index
      %c0_71 = arith.constant 0 : index
      %276 = vector.load %arg7[%c0_70, %c0_71] : memref<2x32xf32, #tpu.memory_space<vmem>>, vector<2x32xf32>
      tpu.vector_store %arg7[%c0_70, %c0_71], %262 {strides = array<i32>} : memref<2x32xf32, #tpu.memory_space<vmem>>, vector<2x32xf32>,
    } else {
    }
    return
  }
  func.func @transform_0(%arg0: i32) -> (i32, i32, i32) {
    %c0_i32 = arith.constant 0 : i32
    %c0_i32_0 = arith.constant 0 : i32
    %c0_i32_1 = arith.constant 0 : i32
    return %arg0, %c0_i32, %c0_i32_0 : i32, i32, i32
  }
  func.func @transform_1(%arg0: i32) -> (i32, i32) {
    %c0_i32 = arith.constant 0 : i32
    %c0_i32_0 = arith.constant 0 : i32
    %c0_i32_1 = arith.constant 0 : i32
    return %c0_i32, %c0_i32_0 : i32, i32
  }
  func.func @transform_2(%arg0: i32) -> (i32, i32) {
    %c0_i32 = arith.constant 0 : i32
    %c0_i32_0 = arith.constant 0 : i32
    %c0_i32_1 = arith.constant 0 : i32
    return %c0_i32, %c0_i32_0 : i32, i32
  }
  func.func @transform_3(%arg0: i32) -> (i32, i32) {
    %c0_i32 = arith.constant 0 : i32
    %c0_i32_0 = arith.constant 0 : i32
    %c0_i32_1 = arith.constant 0 : i32
    return %c0_i32, %c0_i32_0 : i32, i32
  }
  func.func @transform_4(%arg0: i32) -> (i32, i32, i32) {
    %c0_i32 = arith.constant 0 : i32
    %c0_i32_0 = arith.constant 0 : i32
    %c0_i32_1 = arith.constant 0 : i32
    return %arg0, %c0_i32, %c0_i32_0 : i32, i32, i32
  }
  func.func @transform_5(%arg0: i32) -> (i32, i32) {
    %c0_i32 = arith.constant 0 : i32
    %c0_i32_0 = arith.constant 0 : i32
    %c0_i32_1 = arith.constant 0 : i32
    return %c0_i32, %c0_i32_0 : i32, i32
  }
  func.func @transform_6(%arg0: i32) -> (i32, i32) {
    %c0_i32 = arith.constant 0 : i32
    %c0_i32_0 = arith.constant 0 : i32
    %c0_i32_1 = arith.constant 0 : i32
    return %c0_i32, %c0_i32_0 : i32, i32
  }
}

</mosaic_0001>

<llo_original>
// kernel: rnn_model_forward.5
$region0: #{rnn_model_forward.5}
  #allocation0 [shape = 'u32[]', space=smem, size = 0x4, offset = 0x4, fixed_abs, tag = 'smem constant byte address 0x4 - core index']
  #allocation1 [shape = 'u32[144,128]{1,0:T(1,128)}', space=vmem, size = 0x12000, scoped, tag = 'internal scratch']
  #allocation2 [shape = 'f32[16,128]{1,0:T(8,128)}', space=vmem, size = 0x2000, scoped, tag = 'scratch operand']
  %s0 = inlined_call_operand.vmem [shape: bf16[16,16], index: 0, kind: input, shape index: {}]
  %s1 = inlined_call_operand.vmem [shape: bf16[16,128], index: 1, kind: input, shape index: {}]
  %s2 = inlined_call_operand.vmem [shape: f32[1,128], index: 2, kind: input, shape index: {}]
  %s3 = inlined_call_operand.vmem [shape: bf16[16,128], index: 3, kind: output, shape index: {}]
  %s4 = sld [smem:[#allocation0]]
  $region30: #{rnn_model_forward.5} parent=0
    _
  %s6 = ssub.s32 1, %s4
  %s7 = scalar_select 0, %s6, %s4
  // Predicated region
  $region2: #{rnn_model_forward.5} parent=0 // pred_check
    _
  $region3: #{rnn_model_forward.5} parent=0 // pred_check_branch
    %9 = sbr.rel (0) target = $region5
  $region4: #{rnn_model_forward.5} parent=0 // pred_region
    _
  $region5: #{rnn_model_forward.5} parent=0 // pred_fallthru
    _
  // Predicated region
  $region6: #{rnn_model_forward.5} parent=0 // pred_check
    _
  $region7: #{rnn_model_forward.5} parent=0 // pred_check_branch
    %11 = sbr.rel (0) target = $region9
  $region8: #{rnn_model_forward.5} parent=0 // pred_region
    _
  $region9: #{rnn_model_forward.5} parent=0 // pred_fallthru
    _
  // Predicated region
  $region10: #{rnn_model_forward.5} parent=0 // pred_check
    _
  $region11: #{rnn_model_forward.5} parent=0 // pred_check_branch
    %13 = sbr.rel (0) target = $region13
  $region12: #{rnn_model_forward.5} parent=0 // pred_region
    _
  $region13: #{rnn_model_forward.5} parent=0 // pred_fallthru
    _
  %p15 = scmp.eq.s32.totalorder 0, 0
  // Predicated region
  $region14: #{rnn_model_forward.5} parent=0 // pred_check
    %p16 = pneg %p15
  $region15: #{rnn_model_forward.5} parent=0 // pred_check_branch
    %18 = sbr.rel (%p16) target = $region17
  $region16: #{rnn_model_forward.5} parent=0 // pred_region
    %v19 = vld [vmem:[%s2] sm:$0x1]
    %v21 = vlaneseq
    %v22 = vshrl.u32 %v21, 7
    %v23 = vsub.s32 0, %v22
    %v24 = vrot.slane %v19, %v23
    %26 = vst [vmem:[#allocation2] sm:$0xff] %v24
    %27 = vst [vmem:[#allocation2 + $0x8] sm:$0xff] %v24
  $region17: #{rnn_model_forward.5} parent=0 // pred_fallthru
    _
  %v28 = vld [vmem:[#allocation2] sm:$0xff]
  %v29 = vld [vmem:[#allocation2 + $0x8] sm:$0xff]
  %v30 = vld [vmem:[%s0] sm:$0xf]
  %v31 = vld [vmem:[%s0 + $0x4] sm:$0xf]
  %v32 = vld [vmem:[%s1] sm:$0xf]
  %v33 = vld [vmem:[%s1 + $0x4] sm:$0xf]
  %v36 = vunpack.c.l.b16 %v30
  %v37 = vunpack.c.l.b16 %v31
  %v38 = vpack.c.b16 %v37, %v36
  %v41 = vunpack.c.l.b16 %v32
  %v42 = vunpack.c.l.b16 %v33
  %v43 = vpack.c.b16 %v42, %v41
  %vm45 = vcmask 130048
  %v47 = vsel %vm45, %v38, 0
  %49 = vmatprep.subr.bf16.mxu0 0
  %50 = vmatpush1.bf16.msra.mxu0 0
  %51 = vmatprep.subr.bf16.mxu0 0
  %52 = vmatpush1.bf16.msra.mxu0 0
  %53 = vmatprep.subr.bf16.mxu0 0
  %54 = vmatpush1.bf16.msra.mxu0 0
  %55 = vmatprep.subr.bf16.mxu0 0
  %56 = vmatpush1.bf16.msra.mxu0 0
  %57 = vmatprep.subr.bf16.mxu0 0
  %58 = vmatpush1.bf16.msra.mxu0 0
  %59 = vmatprep.subr.bf16.mxu0 0
  %60 = vmatpush1.bf16.msra.mxu0 0
  %61 = vmatprep.subr.bf16.mxu0 0
  %62 = vmatpush1.bf16.msra.mxu0 0
  %63 = vmatprep.subr.bf16.mxu0 0
  %64 = vmatpush1.bf16.msra.mxu0 %v43
  %65 = vmatprep.subr.bf16.mxu0 0
  %66 = vmatpush2.bf16.msra.mxu0 0
  %67 = vmatprep.subr.bf16.mxu0 0
  %68 = vmatpush2.bf16.msra.mxu0 0
  %69 = vmatprep.subr.bf16.mxu0 0
  %70 = vmatpush2.bf16.msra.mxu0 0
  %71 = vmatprep.subr.bf16.mxu0 0
  %72 = vmatpush2.bf16.msra.mxu0 0
  %73 = vmatprep.subr.bf16.mxu0 0
  %74 = vmatpush2.bf16.msra.mxu0 0
  %75 = vmatprep.subr.bf16.mxu0 0
  %76 = vmatpush2.bf16.msra.mxu0 0
  %77 = vmatprep.subr.bf16.mxu0 0
  %78 = vmatpush2.bf16.msra.mxu0 0
  %79 = vmatprep.subr.bf16.mxu0 0
  %80 = vmatpush2.bf16.msra.mxu0 0
  %81 = vmatprep.mubr.bf16.mxu0 0
  %82 = vmatmul.mubr.bf16.gmra.mxu0 %v47
  %v83 = vpop.f32.mrf.mxu0
  %v84 = vadd.f32 0.0, %v83
  %v85 = vpop.f32.mrf.mxu0
  %v86 = vpop.f32.mrf.mxu0
  %v87 = vadd.f32 0.0, %v86
  %v88 = vpop.f32.mrf.mxu0
  %89 = vdwg.mxu0
  %v90 = vadd.f32 %v28, %v84
  %v91 = vadd.f32 %v29, %v87
  %92 = vst [vmem:[#allocation2] sm:$0xff] %v90
  %93 = vst [vmem:[#allocation2 + $0x8] sm:$0xff] %v91
  // Predicated region
  $region18: #{rnn_model_forward.5} parent=0 // pred_check
    %p94 = pneg %p15
  $region19: #{rnn_model_forward.5} parent=0 // pred_check_branch
    %96 = sbr.rel (%p94) target = $region21
  $region20: #{rnn_model_forward.5} parent=0 // pred_region
    %v97 = vld [vmem:[#allocation2] sm:$0xff]
    %v98 = vld [vmem:[#allocation2 + $0x8] sm:$0xff]
    %v99 = vpack.c.bf16 %v98, %v97
    %v101 = vunpack.c.l.b16 %v99
    %v102 = vunpack.c.h.b16 %v99
    %v103 = vpack.c.b16 %v101, %v101
    %v104 = vpack.c.b16 %v102, %v102
    %107 = vst [vmem:[%s3] sm:$0xf] %v103
    %108 = vst [vmem:[%s3 + $0x4] sm:$0xf] %v104
  $region21: #{rnn_model_forward.5} parent=0 // pred_fallthru
    _
  // Predicated region
  $region22: #{rnn_model_forward.5} parent=0 // pred_check
    _
  $region23: #{rnn_model_forward.5} parent=0 // pred_check_branch
    %110 = sbr.rel (0) target = $region25
  $region24: #{rnn_model_forward.5} parent=0 // pred_region
    _
  $region25: #{rnn_model_forward.5} parent=0 // pred_fallthru
    _
  // Predicated region
  $region26: #{rnn_model_forward.5} parent=0 // pred_check
    _
  $region27: #{rnn_model_forward.5} parent=0 // pred_check_branch
    %112 = sbr.rel (0) target = $region29
  $region28: #{rnn_model_forward.5} parent=0 // pred_region
    _
  $region29: #{rnn_model_forward.5} parent=0 // pred_fallthru
    _

// kernel: rnn_model_forward.9
$region0: #{rnn_model_forward.9}
  #allocation0 [shape = 'u32[]', space=smem, size = 0x4, offset = 0x4, fixed_abs, tag = 'smem constant byte address 0x4 - core index']
  #allocation1 [shape = 'u32[144,128]{1,0:T(1,128)}', space=vmem, size = 0x12000, scoped, tag = 'internal scratch']
  #allocation2 [shape = 'f32[16,50]{1,0:T(8,128)}', space=vmem, size = 0x2000, scoped, tag = 'scratch operand']
  %s0 = inlined_call_operand.vmem [shape: bf16[16,32], index: 0, kind: input, shape index: {}]
  %s1 = inlined_call_operand.vmem [shape: bf16[32,50], index: 1, kind: input, shape index: {}]
  %s2 = inlined_call_operand.vmem [shape: f32[1,50], index: 2, kind: input, shape index: {}]
  %s3 = inlined_call_operand.hbm [shape: f32[16,50], index: 3, kind: output, shape index: {}]
  %s4 = sld [smem:[#allocation0]]
  $region30: #{rnn_model_forward.9} parent=0
    _
  %s6 = ssub.s32 1, %s4
  %s7 = scalar_select 0, %s6, %s4
  $region1: #{rnn_model_forward.9} parent=0
    #allocation3 [shape = 'u8[8192]{0}', space=vmem, size = 0x2000, scoped, tag = 'output window, operand 0, single buffered']
    #allocation4 [shape = 's32[1]{0}', space=sflag, size = 0x4, scoped, tag = 'scoped memory for rnn_model_forward.9']
    %8 = vsyncpa [#allocation4], 0
    // Predicated region
    $region2: #{rnn_model_forward.9} parent=1 // pred_check
      _
    $region3: #{rnn_model_forward.9} parent=1 // pred_check_branch
      %10 = sbr.rel (0) target = $region5
    $region4: #{rnn_model_forward.9} parent=1 // pred_region
      _
    $region5: #{rnn_model_forward.9} parent=1 // pred_fallthru
      _
    // Predicated region
    $region6: #{rnn_model_forward.9} parent=1 // pred_check
      _
    $region7: #{rnn_model_forward.9} parent=1 // pred_check_branch
      %12 = sbr.rel (0) target = $region9
    $region8: #{rnn_model_forward.9} parent=1 // pred_region
      _
    $region9: #{rnn_model_forward.9} parent=1 // pred_fallthru
      _
    // Predicated region
    $region10: #{rnn_model_forward.9} parent=1 // pred_check
      _
    $region11: #{rnn_model_forward.9} parent=1 // pred_check_branch
      %14 = sbr.rel (0) target = $region13
    $region12: #{rnn_model_forward.9} parent=1 // pred_region
      _
    $region13: #{rnn_model_forward.9} parent=1 // pred_fallthru
      _
    %p16 = scmp.eq.s32.totalorder 0, 0
    // Predicated region
    $region14: #{rnn_model_forward.9} parent=1 // pred_check
      %p17 = pneg %p16
    $region15: #{rnn_model_forward.9} parent=1 // pred_check_branch
      %19 = sbr.rel (%p17) target = $region17
    $region16: #{rnn_model_forward.9} parent=1 // pred_region
      %v20 = vld [vmem:[%s2] sm:$0x1]
      %v22 = vlaneseq
      %v23 = vshrl.u32 %v22, 7
      %v24 = vsub.s32 0, %v23
      %v25 = vrot.slane %v20, %v24
      %vm27 = vcmask 408576
      %28 = vst.msk [vmem:[#allocation2] sm:$0xff] %vm27, %v25
      %29 = vst.msk [vmem:[#allocation2 + $0x8] sm:$0xff] %vm27, %v25
    $region17: #{rnn_model_forward.9} parent=1 // pred_fallthru
      _
    %v30 = vld [vmem:[#allocation2] sm:$0xff]
    %v31 = vld [vmem:[#allocation2 + $0x8] sm:$0xff]
    %v32 = vld [vmem:[%s0] sm:$0xf]
    %v33 = vld [vmem:[%s0 + $0x4] sm:$0xf]
    %v34 = vld [vmem:[%s1] sm:$0xf]
    %v35 = vld [vmem:[%s1 + $0x4] sm:$0xf]
    %v36 = vld [vmem:[%s1 + $0x8] sm:$0xf]
    %v37 = vld [vmem:[%s1 + $0xc] sm:$0xf]
    %v40 = vunpack.c.l.b16 %v32
    %v41 = vunpack.c.l.b16 %v33
    %v42 = vpack.c.b16 %v41, %v40
    %v47 = vunpack.c.l.b16 %v34
    %v48 = vunpack.c.l.b16 %v35
    %v49 = vunpack.c.l.b16 %v36
    %v50 = vunpack.c.l.b16 %v37
    %v51 = vpack.c.b16 %v48, %v47
    %v52 = vpack.c.b16 %v50, %v49
    %vm55 = vcmask 261120
    %v57 = vsel %vm55, %v42, 0
    %59 = vmatprep.subr.bf16.mxu0 0
    %60 = vmatpush1.bf16.msra.mxu0 0
    %61 = vmatprep.subr.bf16.mxu0 0
    %62 = vmatpush1.bf16.msra.mxu0 0
    %63 = vmatprep.subr.bf16.mxu0 0
    %64 = vmatpush1.bf16.msra.mxu0 0
    %65 = vmatprep.subr.bf16.mxu0 0
    %66 = vmatpush1.bf16.msra.mxu0 0
    %67 = vmatprep.subr.bf16.mxu0 0
    %68 = vmatpush1.bf16.msra.mxu0 0
    %69 = vmatprep.subr.bf16.mxu0 0
    %70 = vmatpush1.bf16.msra.mxu0 0
    %71 = vmatprep.subr.bf16.mxu0 0
    %72 = vmatpush1.bf16.msra.mxu0 %v52
    %73 = vmatprep.subr.bf16.mxu0 0
    %74 = vmatpush1.bf16.msra.mxu0 %v51
    %75 = vmatprep.subr.bf16.mxu0 0
    %76 = vmatpush2.bf16.msra.mxu0 0
    %77 = vmatprep.subr.bf16.mxu0 0
    %78 = vmatpush2.bf16.msra.mxu0 0
    %79 = vmatprep.subr.bf16.mxu0 0
    %80 = vmatpush2.bf16.msra.mxu0 0
    %81 = vmatprep.subr.bf16.mxu0 0
    %82 = vmatpush2.bf16.msra.mxu0 0
    %83 = vmatprep.subr.bf16.mxu0 0
    %84 = vmatpush2.bf16.msra.mxu0 0
    %85 = vmatprep.subr.bf16.mxu0 0
    %86 = vmatpush2.bf16.msra.mxu0 0
    %87 = vmatprep.subr.bf16.mxu0 0
    %88 = vmatpush2.bf16.msra.mxu0 0
    %89 = vmatprep.subr.bf16.mxu0 0
    %90 = vmatpush2.bf16.msra.mxu0 0
    %91 = vmatprep.mubr.bf16.mxu0 0
    %92 = vmatmul.mubr.bf16.gmra.mxu0 %v57
    %v93 = vpop.f32.mrf.mxu0
    %v94 = vadd.f32 0.0, %v93
    %v95 = vpop.f32.mrf.mxu0
    %v96 = vpop.f32.mrf.mxu0
    %v97 = vadd.f32 0.0, %v96
    %v98 = vpop.f32.mrf.mxu0
    %99 = vdwg.mxu0
    %v100 = vadd.f32 %v30, %v94
    %v101 = vadd.f32 %v31, %v97
    %vm102 = vcmask 408576
    %103 = vst.msk [vmem:[#allocation2] sm:$0xff] %vm102, %v100
    %104 = vst.msk [vmem:[#allocation2 + $0x8] sm:$0xff] %vm102, %v101
    // Predicated region
    $region18: #{rnn_model_forward.9} parent=1 // pred_check
      %p105 = pneg %p16
    $region19: #{rnn_model_forward.9} parent=1 // pred_check_branch
      %107 = sbr.rel (%p105) target = $region21
    $region20: #{rnn_model_forward.9} parent=1 // pred_region
      %v108 = vld [vmem:[#allocation2] sm:$0xff]
      %v109 = vld [vmem:[#allocation2 + $0x8] sm:$0xff]
      %110 = vst.msk [vmem:[#allocation3] sm:$0xff] %vm102, %v108
      %111 = vst.msk [vmem:[#allocation3 + $0x8] sm:$0xff] %vm102, %v109
    $region21: #{rnn_model_forward.9} parent=1 // pred_fallthru
      _
    // Predicated region
    $region22: #{rnn_model_forward.9} parent=1 // pred_check
      _
    $region23: #{rnn_model_forward.9} parent=1 // pred_check_branch
      %113 = sbr.rel (0) target = $region25
    $region24: #{rnn_model_forward.9} parent=1 // pred_region
      %s115 = ssub.s32 256, 256
      %116 = vsyncadd [#allocation4], %s115
      %s117 = sshll.u32 [#allocation3], 4
      %s118 = int_to_ptr.vmem [resolvable:$true] %s117
      %123 = dma.vmem_to_hbm [thread:$0]  %s118, 256, %s3, [#allocation4], 128, 128, 8
    $region25: #{rnn_model_forward.9} parent=1 // pred_fallthru
      _
    // Predicated region
    $region26: #{rnn_model_forward.9} parent=1 // pred_check
      _
    $region27: #{rnn_model_forward.9} parent=1 // pred_check_branch
      %125 = sbr.rel (0) target = $region29
    $region28: #{rnn_model_forward.9} parent=1 // pred_region
      %126 = dma.done [#allocation4], 256
    $region29: #{rnn_model_forward.9} parent=1 // pred_fallthru
      _
    %127 = vsyncpa [#allocation4], 1

// kernel: rnn_model_forward.7
$region0: #{rnn_model_forward.7}
  #allocation0 [shape = 'u32[]', space=smem, size = 0x4, offset = 0x4, fixed_abs, tag = 'smem constant byte address 0x4 - core index']
  #allocation1 [shape = 'u32[144,128]{1,0:T(1,128)}', space=vmem, size = 0x12000, scoped, tag = 'internal scratch']
  #allocation2 [shape = 'f32[16,128]{1,0:T(8,128)}', space=vmem, size = 0x2000, scoped, tag = 'scratch operand']
  %s0 = inlined_call_operand.vmem [shape: bf16[16,32], index: 0, kind: input, shape index: {}]
  %s1 = inlined_call_operand.vmem [shape: bf16[32,128], index: 1, kind: input, shape index: {}]
  %s2 = inlined_call_operand.vmem [shape: f32[1,128], index: 2, kind: input, shape index: {}]
  %s3 = inlined_call_operand.vmem [shape: bf16[16,128], index: 3, kind: output, shape index: {}]
  %s4 = sld [smem:[#allocation0]]
  $region30: #{rnn_model_forward.7} parent=0
    _
  %s6 = ssub.s32 1, %s4
  %s7 = scalar_select 0, %s6, %s4
  // Predicated region
  $region2: #{rnn_model_forward.7} parent=0 // pred_check
    _
  $region3: #{rnn_model_forward.7} parent=0 // pred_check_branch
    %9 = sbr.rel (0) target = $region5
  $region4: #{rnn_model_forward.7} parent=0 // pred_region
    _
  $region5: #{rnn_model_forward.7} parent=0 // pred_fallthru
    _
  // Predicated region
  $region6: #{rnn_model_forward.7} parent=0 // pred_check
    _
  $region7: #{rnn_model_forward.7} parent=0 // pred_check_branch
    %11 = sbr.rel (0) target = $region9
  $region8: #{rnn_model_forward.7} parent=0 // pred_region
    _
  $region9: #{rnn_model_forward.7} parent=0 // pred_fallthru
    _
  // Predicated region
  $region10: #{rnn_model_forward.7} parent=0 // pred_check
    _
  $region11: #{rnn_model_forward.7} parent=0 // pred_check_branch
    %13 = sbr.rel (0) target = $region13
  $region12: #{rnn_model_forward.7} parent=0 // pred_region
    _
  $region13: #{rnn_model_forward.7} parent=0 // pred_fallthru
    _
  %p15 = scmp.eq.s32.totalorder 0, 0
  // Predicated region
  $region14: #{rnn_model_forward.7} parent=0 // pred_check
    %p16 = pneg %p15
  $region15: #{rnn_model_forward.7} parent=0 // pred_check_branch
    %18 = sbr.rel (%p16) target = $region17
  $region16: #{rnn_model_forward.7} parent=0 // pred_region
    %v19 = vld [vmem:[%s2] sm:$0x1]
    %v21 = vlaneseq
    %v22 = vshrl.u32 %v21, 7
    %v23 = vsub.s32 0, %v22
    %v24 = vrot.slane %v19, %v23
    %26 = vst [vmem:[#allocation2] sm:$0xff] %v24
    %27 = vst [vmem:[#allocation2 + $0x8] sm:$0xff] %v24
  $region17: #{rnn_model_forward.7} parent=0 // pred_fallthru
    _
  %v28 = vld [vmem:[#allocation2] sm:$0xff]
  %v29 = vld [vmem:[#allocation2 + $0x8] sm:$0xff]
  %v30 = vld [vmem:[%s0] sm:$0xf]
  %v31 = vld [vmem:[%s0 + $0x4] sm:$0xf]
  %v32 = vld [vmem:[%s1] sm:$0xf]
  %v33 = vld [vmem:[%s1 + $0x4] sm:$0xf]
  %v34 = vld [vmem:[%s1 + $0x8] sm:$0xf]
  %v35 = vld [vmem:[%s1 + $0xc] sm:$0xf]
  %v38 = vunpack.c.l.b16 %v30
  %v39 = vunpack.c.l.b16 %v31
  %v40 = vpack.c.b16 %v39, %v38
  %v45 = vunpack.c.l.b16 %v32
  %v46 = vunpack.c.l.b16 %v33
  %v47 = vunpack.c.l.b16 %v34
  %v48 = vunpack.c.l.b16 %v35
  %v49 = vpack.c.b16 %v46, %v45
  %v50 = vpack.c.b16 %v48, %v47
  %vm53 = vcmask 261120
  %v55 = vsel %vm53, %v40, 0
  %57 = vmatprep.subr.bf16.mxu0 0
  %58 = vmatpush1.bf16.msra.mxu0 0
  %59 = vmatprep.subr.bf16.mxu0 0
  %60 = vmatpush1.bf16.msra.mxu0 0
  %61 = vmatprep.subr.bf16.mxu0 0
  %62 = vmatpush1.bf16.msra.mxu0 0
  %63 = vmatprep.subr.bf16.mxu0 0
  %64 = vmatpush1.bf16.msra.mxu0 0
  %65 = vmatprep.subr.bf16.mxu0 0
  %66 = vmatpush1.bf16.msra.mxu0 0
  %67 = vmatprep.subr.bf16.mxu0 0
  %68 = vmatpush1.bf16.msra.mxu0 0
  %69 = vmatprep.subr.bf16.mxu0 0
  %70 = vmatpush1.bf16.msra.mxu0 %v50
  %71 = vmatprep.subr.bf16.mxu0 0
  %72 = vmatpush1.bf16.msra.mxu0 %v49
  %73 = vmatprep.subr.bf16.mxu0 0
  %74 = vmatpush2.bf16.msra.mxu0 0
  %75 = vmatprep.subr.bf16.mxu0 0
  %76 = vmatpush2.bf16.msra.mxu0 0
  %77 = vmatprep.subr.bf16.mxu0 0
  %78 = vmatpush2.bf16.msra.mxu0 0
  %79 = vmatprep.subr.bf16.mxu0 0
  %80 = vmatpush2.bf16.msra.mxu0 0
  %81 = vmatprep.subr.bf16.mxu0 0
  %82 = vmatpush2.bf16.msra.mxu0 0
  %83 = vmatprep.subr.bf16.mxu0 0
  %84 = vmatpush2.bf16.msra.mxu0 0
  %85 = vmatprep.subr.bf16.mxu0 0
  %86 = vmatpush2.bf16.msra.mxu0 0
  %87 = vmatprep.subr.bf16.mxu0 0
  %88 = vmatpush2.bf16.msra.mxu0 0
  %89 = vmatprep.mubr.bf16.mxu0 0
  %90 = vmatmul.mubr.bf16.gmra.mxu0 %v55
  %v91 = vpop.f32.mrf.mxu0
  %v92 = vadd.f32 0.0, %v91
  %v93 = vpop.f32.mrf.mxu0
  %v94 = vpop.f32.mrf.mxu0
  %v95 = vadd.f32 0.0, %v94
  %v96 = vpop.f32.mrf.mxu0
  %97 = vdwg.mxu0
  %v98 = vadd.f32 %v28, %v92
  %v99 = vadd.f32 %v29, %v95
  %100 = vst [vmem:[#allocation2] sm:$0xff] %v98
  %101 = vst [vmem:[#allocation2 + $0x8] sm:$0xff] %v99
  // Predicated region
  $region18: #{rnn_model_forward.7} parent=0 // pred_check
    %p102 = pneg %p15
  $region19: #{rnn_model_forward.7} parent=0 // pred_check_branch
    %104 = sbr.rel (%p102) target = $region21
  $region20: #{rnn_model_forward.7} parent=0 // pred_region
    %v105 = vld [vmem:[#allocation2] sm:$0xff]
    %v106 = vld [vmem:[#allocation2 + $0x8] sm:$0xff]
    %v107 = vpack.c.bf16 %v106, %v105
    %v109 = vunpack.c.l.b16 %v107
    %v110 = vunpack.c.h.b16 %v107
    %v111 = vpack.c.b16 %v109, %v109
    %v112 = vpack.c.b16 %v110, %v110
    %115 = vst [vmem:[%s3] sm:$0xf] %v111
    %116 = vst [vmem:[%s3 + $0x4] sm:$0xf] %v112
  $region21: #{rnn_model_forward.7} parent=0 // pred_fallthru
    _
  // Predicated region
  $region22: #{rnn_model_forward.7} parent=0 // pred_check
    _
  $region23: #{rnn_model_forward.7} parent=0 // pred_check_branch
    %118 = sbr.rel (0) target = $region25
  $region24: #{rnn_model_forward.7} parent=0 // pred_region
    _
  $region25: #{rnn_model_forward.7} parent=0 // pred_fallthru
    _
  // Predicated region
  $region26: #{rnn_model_forward.7} parent=0 // pred_check
    _
  $region27: #{rnn_model_forward.7} parent=0 // pred_check_branch
    %120 = sbr.rel (0) target = $region29
  $region28: #{rnn_model_forward.7} parent=0 // pred_region
    _
  $region29: #{rnn_model_forward.7} parent=0 // pred_fallthru
    _

// kernel: rnn_model_forward.6
$region0: #{rnn_model_forward.6}
  #allocation0 [shape = 'u32[]', space=smem, size = 0x4, offset = 0x4, fixed_abs, tag = 'smem constant byte address 0x4 - core index']
  #allocation1 [shape = 'u32[144,128]{1,0:T(1,128)}', space=vmem, size = 0x12000, scoped, tag = 'internal scratch']
  #allocation2 [shape = 'f32[2,32]{1,0:T(2,128)}', space=vmem, size = 0x400, scoped, tag = 'scratch operand']
  #allocation3 [shape = 'f32[2,32]{1,0:T(2,128)}', space=vmem, size = 0x400, scoped, tag = 'scratch operand']
  %s0 = inlined_call_operand.vmem [shape: bf16[8,2,128], index: 0, kind: input, shape index: {}]
  %s1 = inlined_call_operand.vmem [shape: bf16[32,128], index: 1, kind: input, shape index: {}]
  %s2 = inlined_call_operand.vmem [shape: f32[2,32], index: 2, kind: input, shape index: {}]
  %s3 = inlined_call_operand.vmem [shape: f32[2,32], index: 3, kind: input, shape index: {}]
  %s4 = inlined_call_operand.vmem [shape: bf16[8,2,32], index: 4, kind: output, shape index: {0}]
  %s5 = inlined_call_operand.vmem [shape: f32[2,32], index: 5, kind: output, shape index: {1}]
  %s6 = inlined_call_operand.vmem [shape: f32[2,32], index: 6, kind: output, shape index: {2}]
  %7 = xla_tuple %s4, %s5, %s6
  %s8 = sld [smem:[#allocation0]]
  $region50: #{rnn_model_forward.6} parent=0
    _
  %s10 = ssub.s32 1, %s8
  %s11 = scalar_select 0, %s10, %s8
  // Predicated region
  $region2: #{rnn_model_forward.6} parent=0 // pred_check
    _
  $region3: #{rnn_model_forward.6} parent=0 // pred_check_branch
    %13 = sbr.rel (0) target = $region5
  $region4: #{rnn_model_forward.6} parent=0 // pred_region
    _
  $region5: #{rnn_model_forward.6} parent=0 // pred_fallthru
    _
  // Predicated region
  $region6: #{rnn_model_forward.6} parent=0 // pred_check
    _
  $region7: #{rnn_model_forward.6} parent=0 // pred_check_branch
    %15 = sbr.rel (0) target = $region9
  $region8: #{rnn_model_forward.6} parent=0 // pred_region
    _
  $region9: #{rnn_model_forward.6} parent=0 // pred_fallthru
    _
  // Predicated region
  $region10: #{rnn_model_forward.6} parent=0 // pred_check
    _
  $region11: #{rnn_model_forward.6} parent=0 // pred_check_branch
    %17 = sbr.rel (0) target = $region13
  $region12: #{rnn_model_forward.6} parent=0 // pred_region
    _
  $region13: #{rnn_model_forward.6} parent=0 // pred_fallthru
    _
  // Predicated region
  $region14: #{rnn_model_forward.6} parent=0 // pred_check
    _
  $region15: #{rnn_model_forward.6} parent=0 // pred_check_branch
    %19 = sbr.rel (0) target = $region17
  $region16: #{rnn_model_forward.6} parent=0 // pred_region
    _
  $region17: #{rnn_model_forward.6} parent=0 // pred_fallthru
    _
  %p21 = scmp.eq.s32.totalorder 0, 0
  // Predicated region
  $region18: #{rnn_model_forward.6} parent=0 // pred_check
    %p22 = pneg %p21
  $region19: #{rnn_model_forward.6} parent=0 // pred_check_branch
    %24 = sbr.rel (%p22) target = $region21
  $region20: #{rnn_model_forward.6} parent=0 // pred_region
    %v25 = vld [vmem:[%s2] sm:$0x3]
    %vm26 = vcmask 254976
    %27 = vst.msk [vmem:[#allocation2] sm:$0x3] %vm26, %v25
    %v28 = vld [vmem:[%s3] sm:$0x3]
    %29 = vst.msk [vmem:[#allocation3] sm:$0x3] %vm26, %v28
  $region21: #{rnn_model_forward.6} parent=0 // pred_fallthru
    _
  %v30 = vld [vmem:[%s1] sm:$0xf]
  %v31 = vld [vmem:[%s1 + $0x4] sm:$0xf]
  %v32 = vld [vmem:[%s1 + $0x8] sm:$0xf]
  %v33 = vld [vmem:[%s1 + $0xc] sm:$0xf]
  %v34 = vld [vmem:[#allocation2] sm:$0x3]
  %v35 = vld [vmem:[#allocation3] sm:$0x3]
  %v36 = vld [vmem:[%s0] sm:$0x1]
  %v37 = vunpack.c.l.bf16 %v36
  %v38 = vpack.c.bf16 %v34, %v34
  %v43 = vunpack.c.l.b16 %v30
  %v44 = vunpack.c.l.b16 %v31
  %v45 = vunpack.c.l.b16 %v32
  %v46 = vunpack.c.l.b16 %v33
  %v47 = vpack.c.b16 %v44, %v43
  %v48 = vpack.c.b16 %v46, %v45
  %vm51 = vcmask 261120
  %v53 = vsel %vm51, %v38, 0
  %55 = vmatprep.subr.bf16.mxu0 0
  %56 = vmatpush1.bf16.msra.mxu0 0
  %57 = vmatprep.subr.bf16.mxu0 0
  %58 = vmatpush1.bf16.msra.mxu0 0
  %59 = vmatprep.subr.bf16.mxu0 0
  %60 = vmatpush1.bf16.msra.mxu0 0
  %61 = vmatprep.subr.bf16.mxu0 0
  %62 = vmatpush1.bf16.msra.mxu0 0
  %63 = vmatprep.subr.bf16.mxu0 0
  %64 = vmatpush1.bf16.msra.mxu0 0
  %65 = vmatprep.subr.bf16.mxu0 0
  %66 = vmatpush1.bf16.msra.mxu0 0
  %67 = vmatprep.subr.bf16.mxu0 0
  %68 = vmatpush1.bf16.msra.mxu0 %v48
  %69 = vmatprep.subr.bf16.mxu0 0
  %70 = vmatpush1.bf16.msra.mxu0 %v47
  %71 = vmatprep.subr.bf16.mxu0 0
  %72 = vmatpush2.bf16.msra.mxu0 0
  %73 = vmatprep.subr.bf16.mxu0 0
  %74 = vmatpush2.bf16.msra.mxu0 0
  %75 = vmatprep.subr.bf16.mxu0 0
  %76 = vmatpush2.bf16.msra.mxu0 0
  %77 = vmatprep.subr.bf16.mxu0 0
  %78 = vmatpush2.bf16.msra.mxu0 0
  %79 = vmatprep.subr.bf16.mxu0 0
  %80 = vmatpush2.bf16.msra.mxu0 0
  %81 = vmatprep.subr.bf16.mxu0 0
  %82 = vmatpush2.bf16.msra.mxu0 0
  %83 = vmatprep.subr.bf16.mxu0 0
  %84 = vmatpush2.bf16.msra.mxu0 0
  %85 = vmatprep.subr.bf16.mxu0 0
  %86 = vmatpush2.bf16.msra.mxu0 0
  %87 = vmatprep.mubr.bf16.mxu0 0
  %88 = vmatmul.mubr.bf16.gmra.mxu0 %v53
  %v89 = vpop.f32.mrf.mxu0
  %v90 = vadd.f32 0.0, %v89
  %v91 = vpop.f32.mrf.mxu0
  %v92 = vpop.f32.mrf.mxu0
  %v93 = vpop.f32.mrf.mxu0
  %94 = vdwg.mxu0
  %v95 = vadd.f32 %v37, %v90
  %v96 = vxor.u32 %v95, 2147483648
  %v97 = vmul.f32 %v96, 1.442695
  %v98 = vpow.pop %v97
  %v99 = vadd.f32 %v98, 1.0
  %v100 = vrcp.pop %v99
  %v101 = vmul.f32 1.0, %v100
  %v102 = vtanh.pop %v95
  %v105 = vunpack.c.l.s4 1983009808
  %v106 = vunpack.c.0.s8 %v105
  %v107 = vlaneseq
  %v108 = vshrl.u32 %v107, 7
  %v109 = vsub.s32 %v106, %v108
  %v110 = vrot.slane %v35, %v109
  %111 = vrot.lane.b32.xlu0 %v110, 32
  %v112 = vpop.permute.xlu0 %111
  %v114 = vmul.f32 %v101, %v112
  %116 = vrot.lane.b32.xlu0 %v102, 64
  %v117 = vpop.permute.xlu0 %116
  %v119 = vmul.f32 %v101, %v117
  %121 = vrot.lane.b32.xlu0 %v119, 32
  %v122 = vpop.permute.xlu0 %121
  %v124 = vadd.f32 %v114, %v122
  %v125 = vtanh.pop %v124
  %127 = vrot.lane.b32.xlu0 %v125, 64
  %v128 = vpop.permute.xlu0 %127
  %v130 = vmul.f32 %v101, %v128
  %v131 = vpack.c.bf16 %v130, %v130
  %v134 = vunpack.c.l.s4 1966171168
  %v135 = vunpack.c.0.s8 %v134
  %v136 = vlaneseq
  %v137 = vshrl.u32 %v136, 7
  %v138 = vsub.s32 %v135, %v137
  %v139 = vrot.slane %v131, %v138
  %v141 = vunpack.c.l.s4 1966171168
  %v142 = vunpack.c.0.s8 %v141
  %v143 = vlaneseq
  %v144 = vshrl.u32 %v143, 7
  %v145 = vsub.s32 %v142, %v144
  %v146 = vrot.slane %v139, %v145
  %147 = vrot.lane.b32.xlu0 %v146, 32
  %v148 = vpop.permute.xlu0 %147
  %vm150 = vcmask 253952
  %151 = vst.msk [vmem:[%s4] sm:$0x1] %vm150, %v148
  %s152 = scalar_lea.vmem %s0, 1
  %v153 = vld [vmem:[%s152] sm:$0x1]
  %v154 = vunpack.c.l.bf16 %v153
  %155 = vrot.lane.b32.xlu0 %v131, 32
  %v156 = vpop.permute.xlu0 %155
  %v158 = vsel %vm51, %v156, 0
  %160 = vmatprep.subr.bf16.mxu0 0
  %161 = vmatpush1.bf16.msra.mxu0 0
  %162 = vmatprep.subr.bf16.mxu0 0
  %163 = vmatpush1.bf16.msra.mxu0 0
  %164 = vmatprep.subr.bf16.mxu0 0
  %165 = vmatpush1.bf16.msra.mxu0 0
  %166 = vmatprep.subr.bf16.mxu0 0
  %167 = vmatpush1.bf16.msra.mxu0 0
  %168 = vmatprep.subr.bf16.mxu0 0
  %169 = vmatpush1.bf16.msra.mxu0 0
  %170 = vmatprep.subr.bf16.mxu0 0
  %171 = vmatpush1.bf16.msra.mxu0 0
  %172 = vmatprep.subr.bf16.mxu0 0
  %173 = vmatpush1.bf16.msra.mxu0 %v48
  %174 = vmatprep.subr.bf16.mxu0 0
  %175 = vmatpush1.bf16.msra.mxu0 %v47
  %176 = vmatprep.subr.bf16.mxu0 0
  %177 = vmatpush2.bf16.msra.mxu0 0
  %178 = vmatprep.subr.bf16.mxu0 0
  %179 = vmatpush2.bf16.msra.mxu0 0
  %180 = vmatprep.subr.bf16.mxu0 0
  %181 = vmatpush2.bf16.msra.mxu0 0
  %182 = vmatprep.subr.bf16.mxu0 0
  %183 = vmatpush2.bf16.msra.mxu0 0
  %184 = vmatprep.subr.bf16.mxu0 0
  %185 = vmatpush2.bf16.msra.mxu0 0
  %186 = vmatprep.subr.bf16.mxu0 0
  %187 = vmatpush2.bf16.msra.mxu0 0
  %188 = vmatprep.subr.bf16.mxu0 0
  %189 = vmatpush2.bf16.msra.mxu0 0
  %190 = vmatprep.subr.bf16.mxu0 0
  %191 = vmatpush2.bf16.msra.mxu0 0
  %192 = vmatprep.mubr.bf16.mxu0 0
  %193 = vmatmul.mubr.bf16.gmra.mxu0 %v158
  %v194 = vpop.f32.mrf.mxu0
  %v195 = vadd.f32 0.0, %v194
  %v196 = vpop.f32.mrf.mxu0
  %v197 = vpop.f32.mrf.mxu0
  %v198 = vpop.f32.mrf.mxu0
  %199 = vdwg.mxu0
  %v200 = vadd.f32 %v154, %v195
  %v201 = vxor.u32 %v200, 2147483648
  %v202 = vmul.f32 %v201, 1.442695
  %v203 = vpow.pop %v202
  %v204 = vadd.f32 %v203, 1.0
  %v205 = vrcp.pop %v204
  %v206 = vmul.f32 1.0, %v205
  %v207 = vtanh.pop %v200
  %v208 = vmul.f32 %v206, %v124
  %210 = vrot.lane.b32.xlu0 %v207, 64
  %v211 = vpop.permute.xlu0 %210
  %v213 = vmul.f32 %v206, %v211
  %215 = vrot.lane.b32.xlu0 %v213, 32
  %v216 = vpop.permute.xlu0 %215
  %v218 = vadd.f32 %v208, %v216
  %v219 = vtanh.pop %v218
  %221 = vrot.lane.b32.xlu0 %v219, 64
  %v222 = vpop.permute.xlu0 %221
  %v224 = vmul.f32 %v206, %v222
  %v225 = vpack.c.bf16 %v224, %v224
  %v228 = vunpack.c.l.s4 1966171168
  %v229 = vunpack.c.0.s8 %v228
  %v230 = vlaneseq
  %v231 = vshrl.u32 %v230, 7
  %v232 = vsub.s32 %v229, %v231
  %v233 = vrot.slane %v225, %v232
  %v235 = vunpack.c.l.s4 1966171168
  %v236 = vunpack.c.0.s8 %v235
  %v237 = vlaneseq
  %v238 = vshrl.u32 %v237, 7
  %v239 = vsub.s32 %v236, %v238
  %v240 = vrot.slane %v233, %v239
  %241 = vrot.lane.b32.xlu0 %v240, 32
  %v242 = vpop.permute.xlu0 %241
  %s244 = scalar_lea.vmem %s4, 1
  %245 = vst.msk [vmem:[%s244] sm:$0x1] %vm150, %v242
  %s246 = scalar_lea.vmem %s0, 2
  %v247 = vld [vmem:[%s246] sm:$0x1]
  %v248 = vunpack.c.l.bf16 %v247
  %249 = vrot.lane.b32.xlu0 %v225, 32
  %v250 = vpop.permute.xlu0 %249
  %v252 = vsel %vm51, %v250, 0
  %254 = vmatprep.subr.bf16.mxu0 0
  %255 = vmatpush1.bf16.msra.mxu0 0
  %256 = vmatprep.subr.bf16.mxu0 0
  %257 = vmatpush1.bf16.msra.mxu0 0
  %258 = vmatprep.subr.bf16.mxu0 0
  %259 = vmatpush1.bf16.msra.mxu0 0
  %260 = vmatprep.subr.bf16.mxu0 0
  %261 = vmatpush1.bf16.msra.mxu0 0
  %262 = vmatprep.subr.bf16.mxu0 0
  %263 = vmatpush1.bf16.msra.mxu0 0
  %264 = vmatprep.subr.bf16.mxu0 0
  %265 = vmatpush1.bf16.msra.mxu0 0
  %266 = vmatprep.subr.bf16.mxu0 0
  %267 = vmatpush1.bf16.msra.mxu0 %v48
  %268 = vmatprep.subr.bf16.mxu0 0
  %269 = vmatpush1.bf16.msra.mxu0 %v47
  %270 = vmatprep.subr.bf16.mxu0 0
  %271 = vmatpush2.bf16.msra.mxu0 0
  %272 = vmatprep.subr.bf16.mxu0 0
  %273 = vmatpush2.bf16.msra.mxu0 0
  %274 = vmatprep.subr.bf16.mxu0 0
  %275 = vmatpush2.bf16.msra.mxu0 0
  %276 = vmatprep.subr.bf16.mxu0 0
  %277 = vmatpush2.bf16.msra.mxu0 0
  %278 = vmatprep.subr.bf16.mxu0 0
  %279 = vmatpush2.bf16.msra.mxu0 0
  %280 = vmatprep.subr.bf16.mxu0 0
  %281 = vmatpush2.bf16.msra.mxu0 0
  %282 = vmatprep.subr.bf16.mxu0 0
  %283 = vmatpush2.bf16.msra.mxu0 0
  %284 = vmatprep.subr.bf16.mxu0 0
  %285 = vmatpush2.bf16.msra.mxu0 0
  %286 = vmatprep.mubr.bf16.mxu0 0
  %287 = vmatmul.mubr.bf16.gmra.mxu0 %v252
  %v288 = vpop.f32.mrf.mxu0
  %v289 = vadd.f32 0.0, %v288
  %v290 = vpop.f32.mrf.mxu0
  %v291 = vpop.f32.mrf.mxu0
  %v292 = vpop.f32.mrf.mxu0
  %293 = vdwg.mxu0
  %v294 = vadd.f32 %v248, %v289
  %v295 = vxor.u32 %v294, 2147483648
  %v296 = vmul.f32 %v295, 1.442695
  %v297 = vpow.pop %v296
  %v298 = vadd.f32 %v297, 1.0
  %v299 = vrcp.pop %v298
  %v300 = vmul.f32 1.0, %v299
  %v301 = vtanh.pop %v294
  %v302 = vmul.f32 %v300, %v218
  %304 = vrot.lane.b32.xlu0 %v301, 64
  %v305 = vpop.permute.xlu0 %304
  %v307 = vmul.f32 %v300, %v305
  %309 = vrot.lane.b32.xlu0 %v307, 32
  %v310 = vpop.permute.xlu0 %309
  %v312 = vadd.f32 %v302, %v310
  %v313 = vtanh.pop %v312
  %315 = vrot.lane.b32.xlu0 %v313, 64
  %v316 = vpop.permute.xlu0 %315
  %v318 = vmul.f32 %v300, %v316
  %v319 = vpack.c.bf16 %v318, %v318
  %v322 = vunpack.c.l.s4 1966171168
  %v323 = vunpack.c.0.s8 %v322
  %v324 = vlaneseq
  %v325 = vshrl.u32 %v324, 7
  %v326 = vsub.s32 %v323, %v325
  %v327 = vrot.slane %v319, %v326
  %v329 = vunpack.c.l.s4 1966171168
  %v330 = vunpack.c.0.s8 %v329
  %v331 = vlaneseq
  %v332 = vshrl.u32 %v331, 7
  %v333 = vsub.s32 %v330, %v332
  %v334 = vrot.slane %v327, %v333
  %335 = vrot.lane.b32.xlu0 %v334, 32
  %v336 = vpop.permute.xlu0 %335
  %s338 = scalar_lea.vmem %s4, 2
  %339 = vst.msk [vmem:[%s338] sm:$0x1] %vm150, %v336
  %s340 = scalar_lea.vmem %s0, 3
  %v341 = vld [vmem:[%s340] sm:$0x1]
  %v342 = vunpack.c.l.bf16 %v341
  %343 = vrot.lane.b32.xlu0 %v319, 32
  %v344 = vpop.permute.xlu0 %343
  %v346 = vsel %vm51, %v344, 0
  %348 = vmatprep.subr.bf16.mxu0 0
  %349 = vmatpush1.bf16.msra.mxu0 0
  %350 = vmatprep.subr.bf16.mxu0 0
  %351 = vmatpush1.bf16.msra.mxu0 0
  %352 = vmatprep.subr.bf16.mxu0 0
  %353 = vmatpush1.bf16.msra.mxu0 0
  %354 = vmatprep.subr.bf16.mxu0 0
  %355 = vmatpush1.bf16.msra.mxu0 0
  %356 = vmatprep.subr.bf16.mxu0 0
  %357 = vmatpush1.bf16.msra.mxu0 0
  %358 = vmatprep.subr.bf16.mxu0 0
  %359 = vmatpush1.bf16.msra.mxu0 0
  %360 = vmatprep.subr.bf16.mxu0 0
  %361 = vmatpush1.bf16.msra.mxu0 %v48
  %362 = vmatprep.subr.bf16.mxu0 0
  %363 = vmatpush1.bf16.msra.mxu0 %v47
  %364 = vmatprep.subr.bf16.mxu0 0
  %365 = vmatpush2.bf16.msra.mxu0 0
  %366 = vmatprep.subr.bf16.mxu0 0
  %367 = vmatpush2.bf16.msra.mxu0 0
  %368 = vmatprep.subr.bf16.mxu0 0
  %369 = vmatpush2.bf16.msra.mxu0 0
  %370 = vmatprep.subr.bf16.mxu0 0
  %371 = vmatpush2.bf16.msra.mxu0 0
  %372 = vmatprep.subr.bf16.mxu0 0
  %373 = vmatpush2.bf16.msra.mxu0 0
  %374 = vmatprep.subr.bf16.mxu0 0
  %375 = vmatpush2.bf16.msra.mxu0 0
  %376 = vmatprep.subr.bf16.mxu0 0
  %377 = vmatpush2.bf16.msra.mxu0 0
  %378 = vmatprep.subr.bf16.mxu0 0
  %379 = vmatpush2.bf16.msra.mxu0 0
  %380 = vmatprep.mubr.bf16.mxu0 0
  %381 = vmatmul.mubr.bf16.gmra.mxu0 %v346
  %v382 = vpop.f32.mrf.mxu0
  %v383 = vadd.f32 0.0, %v382
  %v384 = vpop.f32.mrf.mxu0
  %v385 = vpop.f32.mrf.mxu0
  %v386 = vpop.f32.mrf.mxu0
  %387 = vdwg.mxu0
  %v388 = vadd.f32 %v342, %v383
  %v389 = vxor.u32 %v388, 2147483648
  %v390 = vmul.f32 %v389, 1.442695
  %v391 = vpow.pop %v390
  %v392 = vadd.f32 %v391, 1.0
  %v393 = vrcp.pop %v392
  %v394 = vmul.f32 1.0, %v393
  %v395 = vtanh.pop %v388
  %v396 = vmul.f32 %v394, %v312
  %398 = vrot.lane.b32.xlu0 %v395, 64
  %v399 = vpop.permute.xlu0 %398
  %v401 = vmul.f32 %v394, %v399
  %403 = vrot.lane.b32.xlu0 %v401, 32
  %v404 = vpop.permute.xlu0 %403
  %v406 = vadd.f32 %v396, %v404
  %v407 = vtanh.pop %v406
  %409 = vrot.lane.b32.xlu0 %v407, 64
  %v410 = vpop.permute.xlu0 %409
  %v412 = vmul.f32 %v394, %v410
  %v413 = vpack.c.bf16 %v412, %v412
  %v416 = vunpack.c.l.s4 1966171168
  %v417 = vunpack.c.0.s8 %v416
  %v418 = vlaneseq
  %v419 = vshrl.u32 %v418, 7
  %v420 = vsub.s32 %v417, %v419
  %v421 = vrot.slane %v413, %v420
  %v423 = vunpack.c.l.s4 1966171168
  %v424 = vunpack.c.0.s8 %v423
  %v425 = vlaneseq
  %v426 = vshrl.u32 %v425, 7
  %v427 = vsub.s32 %v424, %v426
  %v428 = vrot.slane %v421, %v427
  %429 = vrot.lane.b32.xlu0 %v428, 32
  %v430 = vpop.permute.xlu0 %429
  %s432 = scalar_lea.vmem %s4, 3
  %433 = vst.msk [vmem:[%s432] sm:$0x1] %vm150, %v430
  %s434 = scalar_lea.vmem %s0, 4
  %v435 = vld [vmem:[%s434] sm:$0x1]
  %v436 = vunpack.c.l.bf16 %v435
  %437 = vrot.lane.b32.xlu0 %v413, 32
  %v438 = vpop.permute.xlu0 %437
  %v440 = vsel %vm51, %v438, 0
  %442 = vmatprep.subr.bf16.mxu0 0
  %443 = vmatpush1.bf16.msra.mxu0 0
  %444 = vmatprep.subr.bf16.mxu0 0
  %445 = vmatpush1.bf16.msra.mxu0 0
  %446 = vmatprep.subr.bf16.mxu0 0
  %447 = vmatpush1.bf16.msra.mxu0 0
  %448 = vmatprep.subr.bf16.mxu0 0
  %449 = vmatpush1.bf16.msra.mxu0 0
  %450 = vmatprep.subr.bf16.mxu0 0
  %451 = vmatpush1.bf16.msra.mxu0 0
  %452 = vmatprep.subr.bf16.mxu0 0
  %453 = vmatpush1.bf16.msra.mxu0 0
  %454 = vmatprep.subr.bf16.mxu0 0
  %455 = vmatpush1.bf16.msra.mxu0 %v48
  %456 = vmatprep.subr.bf16.mxu0 0
  %457 = vmatpush1.bf16.msra.mxu0 %v47
  %458 = vmatprep.subr.bf16.mxu0 0
  %459 = vmatpush2.bf16.msra.mxu0 0
  %460 = vmatprep.subr.bf16.mxu0 0
  %461 = vmatpush2.bf16.msra.mxu0 0
  %462 = vmatprep.subr.bf16.mxu0 0
  %463 = vmatpush2.bf16.msra.mxu0 0
  %464 = vmatprep.subr.bf16.mxu0 0
  %465 = vmatpush2.bf16.msra.mxu0 0
  %466 = vmatprep.subr.bf16.mxu0 0
  %467 = vmatpush2.bf16.msra.mxu0 0
  %468 = vmatprep.subr.bf16.mxu0 0
  %469 = vmatpush2.bf16.msra.mxu0 0
  %470 = vmatprep.subr.bf16.mxu0 0
  %471 = vmatpush2.bf16.msra.mxu0 0
  %472 = vmatprep.subr.bf16.mxu0 0
  %473 = vmatpush2.bf16.msra.mxu0 0
  %474 = vmatprep.mubr.bf16.mxu0 0
  %475 = vmatmul.mubr.bf16.gmra.mxu0 %v440
  %v476 = vpop.f32.mrf.mxu0
  %v477 = vadd.f32 0.0, %v476
  %v478 = vpop.f32.mrf.mxu0
  %v479 = vpop.f32.mrf.mxu0
  %v480 = vpop.f32.mrf.mxu0
  %481 = vdwg.mxu0
  %v482 = vadd.f32 %v436, %v477
  %v483 = vxor.u32 %v482, 2147483648
  %v484 = vmul.f32 %v483, 1.442695
  %v485 = vpow.pop %v484
  %v486 = vadd.f32 %v485, 1.0
  %v487 = vrcp.pop %v486
  %v488 = vmul.f32 1.0, %v487
  %v489 = vtanh.pop %v482
  %v490 = vmul.f32 %v488, %v406
  %492 = vrot.lane.b32.xlu0 %v489, 64
  %v493 = vpop.permute.xlu0 %492
  %v495 = vmul.f32 %v488, %v493
  %497 = vrot.lane.b32.xlu0 %v495, 32
  %v498 = vpop.permute.xlu0 %497
  %v500 = vadd.f32 %v490, %v498
  %v501 = vtanh.pop %v500
  %503 = vrot.lane.b32.xlu0 %v501, 64
  %v504 = vpop.permute.xlu0 %503
  %v506 = vmul.f32 %v488, %v504
  %v507 = vpack.c.bf16 %v506, %v506
  %v510 = vunpack.c.l.s4 1966171168
  %v511 = vunpack.c.0.s8 %v510
  %v512 = vlaneseq
  %v513 = vshrl.u32 %v512, 7
  %v514 = vsub.s32 %v511, %v513
  %v515 = vrot.slane %v507, %v514
  %v517 = vunpack.c.l.s4 1966171168
  %v518 = vunpack.c.0.s8 %v517
  %v519 = vlaneseq
  %v520 = vshrl.u32 %v519, 7
  %v521 = vsub.s32 %v518, %v520
  %v522 = vrot.slane %v515, %v521
  %523 = vrot.lane.b32.xlu0 %v522, 32
  %v524 = vpop.permute.xlu0 %523
  %s526 = scalar_lea.vmem %s4, 4
  %527 = vst.msk [vmem:[%s526] sm:$0x1] %vm150, %v524
  %s528 = scalar_lea.vmem %s0, 5
  %v529 = vld [vmem:[%s528] sm:$0x1]
  %v530 = vunpack.c.l.bf16 %v529
  %531 = vrot.lane.b32.xlu0 %v507, 32
  %v532 = vpop.permute.xlu0 %531
  %v534 = vsel %vm51, %v532, 0
  %536 = vmatprep.subr.bf16.mxu0 0
  %537 = vmatpush1.bf16.msra.mxu0 0
  %538 = vmatprep.subr.bf16.mxu0 0
  %539 = vmatpush1.bf16.msra.mxu0 0
  %540 = vmatprep.subr.bf16.mxu0 0
  %541 = vmatpush1.bf16.msra.mxu0 0
  %542 = vmatprep.subr.bf16.mxu0 0
  %543 = vmatpush1.bf16.msra.mxu0 0
  %544 = vmatprep.subr.bf16.mxu0 0
  %545 = vmatpush1.bf16.msra.mxu0 0
  %546 = vmatprep.subr.bf16.mxu0 0
  %547 = vmatpush1.bf16.msra.mxu0 0
  %548 = vmatprep.subr.bf16.mxu0 0
  %549 = vmatpush1.bf16.msra.mxu0 %v48
  %550 = vmatprep.subr.bf16.mxu0 0
  %551 = vmatpush1.bf16.msra.mxu0 %v47
  %552 = vmatprep.subr.bf16.mxu0 0
  %553 = vmatpush2.bf16.msra.mxu0 0
  %554 = vmatprep.subr.bf16.mxu0 0
  %555 = vmatpush2.bf16.msra.mxu0 0
  %556 = vmatprep.subr.bf16.mxu0 0
  %557 = vmatpush2.bf16.msra.mxu0 0
  %558 = vmatprep.subr.bf16.mxu0 0
  %559 = vmatpush2.bf16.msra.mxu0 0
  %560 = vmatprep.subr.bf16.mxu0 0
  %561 = vmatpush2.bf16.msra.mxu0 0
  %562 = vmatprep.subr.bf16.mxu0 0
  %563 = vmatpush2.bf16.msra.mxu0 0
  %564 = vmatprep.subr.bf16.mxu0 0
  %565 = vmatpush2.bf16.msra.mxu0 0
  %566 = vmatprep.subr.bf16.mxu0 0
  %567 = vmatpush2.bf16.msra.mxu0 0
  %568 = vmatprep.mubr.bf16.mxu0 0
  %569 = vmatmul.mubr.bf16.gmra.mxu0 %v534
  %v570 = vpop.f32.mrf.mxu0
  %v571 = vadd.f32 0.0, %v570
  %v572 = vpop.f32.mrf.mxu0
  %v573 = vpop.f32.mrf.mxu0
  %v574 = vpop.f32.mrf.mxu0
  %575 = vdwg.mxu0
  %v576 = vadd.f32 %v530, %v571
  %v577 = vxor.u32 %v576, 2147483648
  %v578 = vmul.f32 %v577, 1.442695
  %v579 = vpow.pop %v578
  %v580 = vadd.f32 %v579, 1.0
  %v581 = vrcp.pop %v580
  %v582 = vmul.f32 1.0, %v581
  %v583 = vtanh.pop %v576
  %v584 = vmul.f32 %v582, %v500
  %586 = vrot.lane.b32.xlu0 %v583, 64
  %v587 = vpop.permute.xlu0 %586
  %v589 = vmul.f32 %v582, %v587
  %591 = vrot.lane.b32.xlu0 %v589, 32
  %v592 = vpop.permute.xlu0 %591
  %v594 = vadd.f32 %v584, %v592
  %v595 = vtanh.pop %v594
  %597 = vrot.lane.b32.xlu0 %v595, 64
  %v598 = vpop.permute.xlu0 %597
  %v600 = vmul.f32 %v582, %v598
  %v601 = vpack.c.bf16 %v600, %v600
  %v604 = vunpack.c.l.s4 1966171168
  %v605 = vunpack.c.0.s8 %v604
  %v606 = vlaneseq
  %v607 = vshrl.u32 %v606, 7
  %v608 = vsub.s32 %v605, %v607
  %v609 = vrot.slane %v601, %v608
  %v611 = vunpack.c.l.s4 1966171168
  %v612 = vunpack.c.0.s8 %v611
  %v613 = vlaneseq
  %v614 = vshrl.u32 %v613, 7
  %v615 = vsub.s32 %v612, %v614
  %v616 = vrot.slane %v609, %v615
  %617 = vrot.lane.b32.xlu0 %v616, 32
  %v618 = vpop.permute.xlu0 %617
  %s620 = scalar_lea.vmem %s4, 5
  %621 = vst.msk [vmem:[%s620] sm:$0x1] %vm150, %v618
  %s622 = scalar_lea.vmem %s0, 6
  %v623 = vld [vmem:[%s622] sm:$0x1]
  %v624 = vunpack.c.l.bf16 %v623
  %625 = vrot.lane.b32.xlu0 %v601, 32
  %v626 = vpop.permute.xlu0 %625
  %v628 = vsel %vm51, %v626, 0
  %630 = vmatprep.subr.bf16.mxu0 0
  %631 = vmatpush1.bf16.msra.mxu0 0
  %632 = vmatprep.subr.bf16.mxu0 0
  %633 = vmatpush1.bf16.msra.mxu0 0
  %634 = vmatprep.subr.bf16.mxu0 0
  %635 = vmatpush1.bf16.msra.mxu0 0
  %636 = vmatprep.subr.bf16.mxu0 0
  %637 = vmatpush1.bf16.msra.mxu0 0
  %638 = vmatprep.subr.bf16.mxu0 0
  %639 = vmatpush1.bf16.msra.mxu0 0
  %640 = vmatprep.subr.bf16.mxu0 0
  %641 = vmatpush1.bf16.msra.mxu0 0
  %642 = vmatprep.subr.bf16.mxu0 0
  %643 = vmatpush1.bf16.msra.mxu0 %v48
  %644 = vmatprep.subr.bf16.mxu0 0
  %645 = vmatpush1.bf16.msra.mxu0 %v47
  %646 = vmatprep.subr.bf16.mxu0 0
  %647 = vmatpush2.bf16.msra.mxu0 0
  %648 = vmatprep.subr.bf16.mxu0 0
  %649 = vmatpush2.bf16.msra.mxu0 0
  %650 = vmatprep.subr.bf16.mxu0 0
  %651 = vmatpush2.bf16.msra.mxu0 0
  %652 = vmatprep.subr.bf16.mxu0 0
  %653 = vmatpush2.bf16.msra.mxu0 0
  %654 = vmatprep.subr.bf16.mxu0 0
  %655 = vmatpush2.bf16.msra.mxu0 0
  %656 = vmatprep.subr.bf16.mxu0 0
  %657 = vmatpush2.bf16.msra.mxu0 0
  %658 = vmatprep.subr.bf16.mxu0 0
  %659 = vmatpush2.bf16.msra.mxu0 0
  %660 = vmatprep.subr.bf16.mxu0 0
  %661 = vmatpush2.bf16.msra.mxu0 0
  %662 = vmatprep.mubr.bf16.mxu0 0
  %663 = vmatmul.mubr.bf16.gmra.mxu0 %v628
  %v664 = vpop.f32.mrf.mxu0
  %v665 = vadd.f32 0.0, %v664
  %v666 = vpop.f32.mrf.mxu0
  %v667 = vpop.f32.mrf.mxu0
  %v668 = vpop.f32.mrf.mxu0
  %669 = vdwg.mxu0
  %v670 = vadd.f32 %v624, %v665
  %v671 = vxor.u32 %v670, 2147483648
  %v672 = vmul.f32 %v671, 1.442695
  %v673 = vpow.pop %v672
  %v674 = vadd.f32 %v673, 1.0
  %v675 = vrcp.pop %v674
  %v676 = vmul.f32 1.0, %v675
  %v677 = vtanh.pop %v670
  %v678 = vmul.f32 %v676, %v594
  %680 = vrot.lane.b32.xlu0 %v677, 64
  %v681 = vpop.permute.xlu0 %680
  %v683 = vmul.f32 %v676, %v681
  %685 = vrot.lane.b32.xlu0 %v683, 32
  %v686 = vpop.permute.xlu0 %685
  %v688 = vadd.f32 %v678, %v686
  %v689 = vtanh.pop %v688
  %691 = vrot.lane.b32.xlu0 %v689, 64
  %v692 = vpop.permute.xlu0 %691
  %v694 = vmul.f32 %v676, %v692
  %v695 = vpack.c.bf16 %v694, %v694
  %v698 = vunpack.c.l.s4 1966171168
  %v699 = vunpack.c.0.s8 %v698
  %v700 = vlaneseq
  %v701 = vshrl.u32 %v700, 7
  %v702 = vsub.s32 %v699, %v701
  %v703 = vrot.slane %v695, %v702
  %v705 = vunpack.c.l.s4 1966171168
  %v706 = vunpack.c.0.s8 %v705
  %v707 = vlaneseq
  %v708 = vshrl.u32 %v707, 7
  %v709 = vsub.s32 %v706, %v708
  %v710 = vrot.slane %v703, %v709
  %711 = vrot.lane.b32.xlu0 %v710, 32
  %v712 = vpop.permute.xlu0 %711
  %s714 = scalar_lea.vmem %s4, 6
  %715 = vst.msk [vmem:[%s714] sm:$0x1] %vm150, %v712
  %s716 = scalar_lea.vmem %s0, 7
  %v717 = vld [vmem:[%s716] sm:$0x1]
  %v718 = vunpack.c.l.bf16 %v717
  %719 = vrot.lane.b32.xlu0 %v695, 32
  %v720 = vpop.permute.xlu0 %719
  %v722 = vsel %vm51, %v720, 0
  %724 = vmatprep.subr.bf16.mxu0 0
  %725 = vmatpush1.bf16.msra.mxu0 0
  %726 = vmatprep.subr.bf16.mxu0 0
  %727 = vmatpush1.bf16.msra.mxu0 0
  %728 = vmatprep.subr.bf16.mxu0 0
  %729 = vmatpush1.bf16.msra.mxu0 0
  %730 = vmatprep.subr.bf16.mxu0 0
  %731 = vmatpush1.bf16.msra.mxu0 0
  %732 = vmatprep.subr.bf16.mxu0 0
  %733 = vmatpush1.bf16.msra.mxu0 0
  %734 = vmatprep.subr.bf16.mxu0 0
  %735 = vmatpush1.bf16.msra.mxu0 0
  %736 = vmatprep.subr.bf16.mxu0 0
  %737 = vmatpush1.bf16.msra.mxu0 %v48
  %738 = vmatprep.subr.bf16.mxu0 0
  %739 = vmatpush1.bf16.msra.mxu0 %v47
  %740 = vmatprep.subr.bf16.mxu0 0
  %741 = vmatpush2.bf16.msra.mxu0 0
  %742 = vmatprep.subr.bf16.mxu0 0
  %743 = vmatpush2.bf16.msra.mxu0 0
  %744 = vmatprep.subr.bf16.mxu0 0
  %745 = vmatpush2.bf16.msra.mxu0 0
  %746 = vmatprep.subr.bf16.mxu0 0
  %747 = vmatpush2.bf16.msra.mxu0 0
  %748 = vmatprep.subr.bf16.mxu0 0
  %749 = vmatpush2.bf16.msra.mxu0 0
  %750 = vmatprep.subr.bf16.mxu0 0
  %751 = vmatpush2.bf16.msra.mxu0 0
  %752 = vmatprep.subr.bf16.mxu0 0
  %753 = vmatpush2.bf16.msra.mxu0 0
  %754 = vmatprep.subr.bf16.mxu0 0
  %755 = vmatpush2.bf16.msra.mxu0 0
  %756 = vmatprep.mubr.bf16.mxu0 0
  %757 = vmatmul.mubr.bf16.gmra.mxu0 %v722
  %v758 = vpop.f32.mrf.mxu0
  %v759 = vadd.f32 0.0, %v758
  %v760 = vpop.f32.mrf.mxu0
  %v761 = vpop.f32.mrf.mxu0
  %v762 = vpop.f32.mrf.mxu0
  %763 = vdwg.mxu0
  %v764 = vadd.f32 %v718, %v759
  %v765 = vxor.u32 %v764, 2147483648
  %v766 = vmul.f32 %v765, 1.442695
  %v767 = vpow.pop %v766
  %v768 = vadd.f32 %v767, 1.0
  %v769 = vrcp.pop %v768
  %v770 = vmul.f32 1.0, %v769
  %v771 = vtanh.pop %v764
  %v772 = vmul.f32 %v770, %v688
  %774 = vrot.lane.b32.xlu0 %v771, 64
  %v775 = vpop.permute.xlu0 %774
  %v777 = vmul.f32 %v770, %v775
  %779 = vrot.lane.b32.xlu0 %v777, 32
  %v780 = vpop.permute.xlu0 %779
  %v782 = vadd.f32 %v772, %v780
  %v783 = vtanh.pop %v782
  %785 = vrot.lane.b32.xlu0 %v783, 64
  %v786 = vpop.permute.xlu0 %785
  %v788 = vmul.f32 %v770, %v786
  %v789 = vpack.c.bf16 %v788, %v788
  %v792 = vunpack.c.l.s4 1966171168
  %v793 = vunpack.c.0.s8 %v792
  %v794 = vlaneseq
  %v795 = vshrl.u32 %v794, 7
  %v796 = vsub.s32 %v793, %v795
  %v797 = vrot.slane %v789, %v796
  %v799 = vunpack.c.l.s4 1966171168
  %v800 = vunpack.c.0.s8 %v799
  %v801 = vlaneseq
  %v802 = vshrl.u32 %v801, 7
  %v803 = vsub.s32 %v800, %v802
  %v804 = vrot.slane %v797, %v803
  %805 = vrot.lane.b32.xlu0 %v804, 32
  %v806 = vpop.permute.xlu0 %805
  %s808 = scalar_lea.vmem %s4, 7
  %809 = vst.msk [vmem:[%s808] sm:$0x1] %vm150, %v806
  %v812 = vunpack.c.l.s4 1983009808
  %v813 = vunpack.c.0.s8 %v812
  %v814 = vlaneseq
  %v815 = vshrl.u32 %v814, 7
  %v816 = vsub.s32 %v813, %v815
  %v817 = vrot.slane %v788, %v816
  %818 = vrot.lane.b32.xlu0 %v817, 32
  %v819 = vpop.permute.xlu0 %818
  %vm821 = vcmask 254976
  %822 = vst.msk [vmem:[#allocation2] sm:$0x3] %vm821, %v819
  %v825 = vunpack.c.l.s4 1983009808
  %v826 = vunpack.c.0.s8 %v825
  %v827 = vlaneseq
  %v828 = vshrl.u32 %v827, 7
  %v829 = vsub.s32 %v826, %v828
  %v830 = vrot.slane %v782, %v829
  %831 = vrot.lane.b32.xlu0 %v830, 96
  %v832 = vpop.permute.xlu0 %831
  %834 = vst.msk [vmem:[#allocation3] sm:$0x3] %vm821, %v832
  // Predicated region
  $region22: #{rnn_model_forward.6} parent=0 // pred_check
    %p835 = pneg %p21
  $region23: #{rnn_model_forward.6} parent=0 // pred_check_branch
    %837 = sbr.rel (%p835) target = $region25
  $region24: #{rnn_model_forward.6} parent=0 // pred_region
    %838 = vst.msk [vmem:[%s5] sm:$0x3] %vm821, %v819
    %839 = vst.msk [vmem:[%s6] sm:$0x3] %vm821, %v832
  $region25: #{rnn_model_forward.6} parent=0 // pred_fallthru
    _
  // Predicated region
  $region26: #{rnn_model_forward.6} parent=0 // pred_check
    _
  $region27: #{rnn_model_forward.6} parent=0 // pred_check_branch
    %841 = sbr.rel (0) target = $region29
  $region28: #{rnn_model_forward.6} parent=0 // pred_region
    _
  $region29: #{rnn_model_forward.6} parent=0 // pred_fallthru
    _
  // Predicated region
  $region30: #{rnn_model_forward.6} parent=0 // pred_check
    _
  $region31: #{rnn_model_forward.6} parent=0 // pred_check_branch
    %843 = sbr.rel (0) target = $region33
  $region32: #{rnn_model_forward.6} parent=0 // pred_region
    _
  $region33: #{rnn_model_forward.6} parent=0 // pred_fallthru
    _
  // Predicated region
  $region34: #{rnn_model_forward.6} parent=0 // pred_check
    _
  $region35: #{rnn_model_forward.6} parent=0 // pred_check_branch
    %845 = sbr.rel (0) target = $region37
  $region36: #{rnn_model_forward.6} parent=0 // pred_region
    _
  $region37: #{rnn_model_forward.6} parent=0 // pred_fallthru
    _
  // Predicated region
  $region38: #{rnn_model_forward.6} parent=0 // pred_check
    _
  $region39: #{rnn_model_forward.6} parent=0 // pred_check_branch
    %847 = sbr.rel (0) target = $region41
  $region40: #{rnn_model_forward.6} parent=0 // pred_region
    _
  $region41: #{rnn_model_forward.6} parent=0 // pred_fallthru
    _
  // Predicated region
  $region42: #{rnn_model_forward.6} parent=0 // pred_check
    _
  $region43: #{rnn_model_forward.6} parent=0 // pred_check_branch
    %849 = sbr.rel (0) target = $region45
  $region44: #{rnn_model_forward.6} parent=0 // pred_region
    _
  $region45: #{rnn_model_forward.6} parent=0 // pred_fallthru
    _
  // Predicated region
  $region46: #{rnn_model_forward.6} parent=0 // pred_check
    _
  $region47: #{rnn_model_forward.6} parent=0 // pred_check_branch
    %851 = sbr.rel (0) target = $region49
  $region48: #{rnn_model_forward.6} parent=0 // pred_region
    _
  $region49: #{rnn_model_forward.6} parent=0 // pred_fallthru
    _

</llo_original>
